<compile_context>
chip_gen: v7x
topology: tpu7x:2x2x1
jax: 0.10.0
libtpu: 0.0.40
codegen_flags: <defaults>
</compile_context>

<pallas_src>
import functools

import jax
import jax.numpy as jnp
from jax import lax
from jax.experimental import pallas as pl
from jax.experimental.pallas import tpu as pltpu


def _mha_kernel(x_ref, wqkv_ref, bqkv_ref, wo_ref, bo_ref, o_ref, *,
                B, S, heads, d_k, d_model, fact):
    # x_ref: (B*S, Din) — whole (flattened) batch in one grid step.
    x = x_ref[...]

    # Fused Q/K/V projection: one MXU matmul, f32 accumulation.
    qkv = jnp.dot(x, wqkv_ref[...], preferred_element_type=jnp.float32) + bqkv_ref[0]

    wo = wo_ref[...]            # (d_model, d_model)
    bo = bo_ref[0]              # (d_model,)

    # B and heads are small & static -> unroll in Python.
    for b in range(B):
        r0 = b * S
        # Fused head-concat + output projection accumulator (starts at bias).
        acc = jnp.zeros((S, d_model), jnp.float32) + bo
        for h in range(heads):
            c0 = h * d_k
            q_h = qkv[r0:r0 + S, c0:c0 + d_k]                                   # (S, d_k)
            k_h = qkv[r0:r0 + S, d_model + c0:d_model + c0 + d_k]               # (S, d_k)
            v_h = qkv[r0:r0 + S, 2 * d_model + c0:2 * d_model + c0 + d_k]       # (S, d_k)

            # scores = q k^T / sqrt(d_k) — contract dim 1 of both operands,
            # no explicit transpose.
            score = lax.dot_general(
                q_h, k_h, (((1,), (1,)), ((), ())),
                preferred_element_type=jnp.float32) * fact                      # (S, S)

            # Numerically-stable softmax (kept fully in f32).
            m = jnp.max(score, axis=-1, keepdims=True)
            p = jnp.exp(score - m)
            denom = jnp.sum(p, axis=-1, keepdims=True)
            att = p * pl.reciprocal(denom, approx=True)
            # TODO(synk): attention-matrix dropout omitted (eval semantics).

            ctx = jnp.dot(att, v_h, preferred_element_type=jnp.float32)         # (S, d_k)
            # Head-concat fused into the output projection.
            acc = acc + jnp.dot(ctx, wo[c0:c0 + d_k, :],
                                preferred_element_type=jnp.float32)

        o_ref[r0:r0 + S, :] = acc.astype(o_ref.dtype)


def multi_head_attention(x, params, *, heads):
    """x: (B, S, input_dim) float32 -> (B, S, d_model) float32 (mask=None)."""
    B, S, Din = x.shape
    wq, bq, wk, bk, wv, bv, wo, bo = params
    d_model = wq.shape[1]
    d_k = d_model // heads
    fact = 1.0 / float(d_k) ** 0.5

    # Fuse the three projection weights/biases (done once in the wrapper).
    wqkv = jnp.concatenate([wq, wk, wv], axis=1)        # (Din, 3*d_model)
    bqkv = jnp.concatenate([bq, bk, bv], axis=1)        # (1, 3*d_model)

    # Collapse the batch into the row dimension: single grid step.
    x2d = x.reshape(B * S, Din)

    kernel = functools.partial(_mha_kernel, B=B, S=S, heads=heads,
                               d_k=d_k, d_model=d_model, fact=fact)

    def full(shape):
        return pl.BlockSpec(shape, lambda i, _s=shape: tuple(0 for _ in _s))

    out2d = pl.pallas_call(
        kernel,
        out_shape=jax.ShapeDtypeStruct((B * S, d_model), x.dtype),
        grid_spec=pltpu.PrefetchScalarGridSpec(
            num_scalar_prefetch=0,
            grid=(1,),
            in_specs=[
                full((B * S, Din)),            # x (flattened)
                full((Din, 3 * d_model)),      # fused Wqkv
                full((1, 3 * d_model)),        # fused bqkv
                full((d_model, d_model)),      # Wo
                full((1, d_model)),            # bo
            ],
            out_specs=full((B * S, d_model)),
        ),
        compiler_params=pltpu.CompilerParams(
            dimension_semantics=("arbitrary",)),
    )(x2d, wqkv, bqkv, wo, bo)

    return out2d.reshape(B, S, d_model)


def _reference(x, params, *, heads):
    """Plain-JAX reference mirroring the PyTorch forward (dropout = eval)."""
    B, S, Din = x.shape
    wq, bq, wk, bk, wv, bv, wo, bo = params
    d_model = wq.shape[1]
    d_k = d_model // heads
    fact = 1.0 / float(d_k) ** 0.5

    q = (x @ wq + bq[0]).reshape(B, S, heads, d_k).transpose(0, 2, 1, 3)
    k = (x @ wk + bk[0]).reshape(B, S, heads, d_k).transpose(0, 2, 1, 3)
    v = (x @ wv + bv[0]).reshape(B, S, heads, d_k).transpose(0, 2, 1, 3)
    score = jnp.einsum("bhqd,bhkd->bhqk", q, k) * fact
    att = jax.nn.softmax(score, axis=-1)
    out = jnp.einsum("bhqk,bhkd->bhqd", att, v)
    concat = out.transpose(0, 2, 1, 3).reshape(B, S, d_model)
    return concat @ wo + bo[0]


if __name__ == "__main__":
    # Small shapes consistent with the module's forward.
    B, S, input_dim = 2, 8, 32
    heads, d_model = 4, 32

    key = jax.random.PRNGKey(0)
    keys = jax.random.split(key, 9)
    scale_in = 1.0 / (input_dim ** 0.5)
    scale_dm = 1.0 / (d_model ** 0.5)

    x = jax.random.normal(keys[0], (B, S, input_dim), dtype=jnp.float32)
    wq = jax.random.uniform(keys[1], (input_dim, d_model), jnp.float32, -scale_in, scale_in)
    bq = jax.random.uniform(keys[2], (1, d_model), jnp.float32, -scale_in, scale_in)
    wk = jax.random.uniform(keys[3], (input_dim, d_model), jnp.float32, -scale_in, scale_in)
    bk = jax.random.uniform(keys[4], (1, d_model), jnp.float32, -scale_in, scale_in)
    wv = jax.random.uniform(keys[5], (input_dim, d_model), jnp.float32, -scale_in, scale_in)
    bv = jax.random.uniform(keys[6], (1, d_model), jnp.float32, -scale_in, scale_in)
    wo = jax.random.uniform(keys[7], (d_model, d_model), jnp.float32, -scale_dm, scale_dm)
    bo = jax.random.uniform(keys[8], (1, d_model), jnp.float32, -scale_dm, scale_dm)

    params = (wq, bq, wk, bk, wv, bv, wo, bo)

    out = multi_head_attention(x, params, heads=heads)
    out = jax.block_until_ready(out)

    ref = _reference(x, params, heads=heads)
    assert out.shape == (B, S, d_model)
    # Tolerance relaxed slightly vs 1e-4 because of approx-reciprocal in the
    # softmax normalization (EUP vrcp, ~<=2^-12 relative error).
    assert jnp.allclose(out, ref, atol=1e-3, rtol=1e-3), "mismatch vs reference"

    print("KERNEL_OK")
</pallas_src>

<mosaic_0001>
module attributes {stable_mosaic.version = 11 : i64} {
  func.func @_mha_kernel(%arg0: i32, %arg1: memref<16x32xf32, #tpu.memory_space<vmem>>, %arg2: memref<32x96xf32, #tpu.memory_space<vmem>>, %arg3: memref<1x96xf32, #tpu.memory_space<vmem>>, %arg4: memref<32x32xf32, #tpu.memory_space<vmem>>, %arg5: memref<1x32xf32, #tpu.memory_space<vmem>>, %arg6: memref<16x32xf32, #tpu.memory_space<vmem>>) attributes {dimension_semantics = [#tpu.dimension_semantics<arbitrary>], iteration_bounds = array<i64: 1>, scalar_prefetch = 0 : i64, scratch_operands = 0 : i64, tpu.core_type = #tpu.core_type<tc>, window_params = [{pipeline_mode = #tpu.pipeline_mode<synchronous>, transform_indices = @transform_0, window_bounds = array<i64: 16, 32>}, {pipeline_mode = #tpu.pipeline_mode<synchronous>, transform_indices = @transform_1, window_bounds = array<i64: 32, 96>}, {pipeline_mode = #tpu.pipeline_mode<synchronous>, transform_indices = @transform_2, window_bounds = array<i64: 1, 96>}, {pipeline_mode = #tpu.pipeline_mode<synchronous>, transform_indices = @transform_3, window_bounds = array<i64: 32, 32>}, {pipeline_mode = #tpu.pipeline_mode<synchronous>, transform_indices = @transform_4, window_bounds = array<i64: 1, 32>}, {pipeline_mode = #tpu.pipeline_mode<synchronous>, transform_indices = @transform_5, window_bounds = array<i64: 16, 32>}]} {
    %c0 = arith.constant 0 : index
    %c0_0 = arith.constant 0 : index
    %0 = vector.load %arg1[%c0, %c0_0] : memref<16x32xf32, #tpu.memory_space<vmem>>, vector<16x32xf32>
    %c0_1 = arith.constant 0 : index
    %c0_2 = arith.constant 0 : index
    %1 = vector.load %arg2[%c0_1, %c0_2] : memref<32x96xf32, #tpu.memory_space<vmem>>, vector<32x96xf32>
    %cst = arith.constant dense<0.000000e+00> : vector<16x96xf32>
    %2 = tpu.matmul %0, %1, %cst {dimension_numbers = #tpu.dot_dimension_numbers<[1], [0], [0], [1], [0, 0, 1, 1], [], []>} : vector<16x32xf32>, vector<32x96xf32>, vector<16x96xf32> -> vector<16x96xf32>
    %c0_3 = arith.constant 0 : index
    %c0_4 = arith.constant 0 : index
    %3 = vector.load %arg3[%c0_3, %c0_4] : memref<1x96xf32, #tpu.memory_space<vmem>>, vector<1x96xf32>
    %4 = vector.shape_cast %3 : vector<1x96xf32> to vector<96xf32>
    %5 = vector.shape_cast %4 : vector<96xf32> to vector<1x96xf32>
    %6 = vector.broadcast %5 : vector<1x96xf32> to vector<16x96xf32>
    %7 = arith.addf %2, %6 : vector<16x96xf32>
    %c0_5 = arith.constant 0 : index
    %c0_6 = arith.constant 0 : index
    %8 = vector.load %arg4[%c0_5, %c0_6] : memref<32x32xf32, #tpu.memory_space<vmem>>, vector<32x32xf32>
    %c0_7 = arith.constant 0 : index
    %c0_8 = arith.constant 0 : index
    %9 = vector.load %arg5[%c0_7, %c0_8] : memref<1x32xf32, #tpu.memory_space<vmem>>, vector<1x32xf32>
    %10 = vector.shape_cast %9 : vector<1x32xf32> to vector<32xf32>
    %cst_9 = arith.constant 0.000000e+00 : f32
    %11 = vector.broadcast %cst_9 : f32 to vector<8x32xf32>
    %12 = vector.shape_cast %10 : vector<32xf32> to vector<1x32xf32>
    %13 = vector.broadcast %12 : vector<1x32xf32> to vector<8x32xf32>
    %14 = arith.addf %11, %13 : vector<8x32xf32>
    %15 = vector.extract_strided_slice %7 {offsets = [0, 0], sizes = [8, 8], strides = [1, 1]} : vector<16x96xf32> to vector<8x8xf32>
    %16 = vector.extract_strided_slice %7 {offsets = [0, 32], sizes = [8, 8], strides = [1, 1]} : vector<16x96xf32> to vector<8x8xf32>
    %17 = vector.extract_strided_slice %7 {offsets = [0, 64], sizes = [8, 8], strides = [1, 1]} : vector<16x96xf32> to vector<8x8xf32>
    %cst_10 = arith.constant dense<0.000000e+00> : vector<8x8xf32>
    %18 = tpu.matmul %15, %16, %cst_10 {dimension_numbers = #tpu.dot_dimension_numbers<[1], [1], [0], [0], [0, 0, 1, 0], [], []>} : vector<8x8xf32>, vector<8x8xf32>, vector<8x8xf32> -> vector<8x8xf32>
    %cst_11 = arith.constant 0.353553385 : f32
    %19 = vector.broadcast %cst_11 : f32 to vector<8x8xf32>
    %20 = arith.mulf %18, %19 : vector<8x8xf32>
    %cst_12 = arith.constant dense<0xFF800000> : vector<8xf32>
    %21 = vector.multi_reduction <maximumf>, %20, %cst_12 [1] : vector<8x8xf32> to vector<8xf32>
    %22 = vector.shape_cast %21 : vector<8xf32> to vector<8x1xf32>
    %23 = vector.broadcast %22 : vector<8x1xf32> to vector<8x8xf32>
    %24 = arith.subf %20, %23 : vector<8x8xf32>
    %25 = math.exp %24 : vector<8x8xf32>
    %cst_13 = arith.constant dense<0.000000e+00> : vector<8xf32>
    %26 = vector.multi_reduction <add>, %25, %cst_13 [1] : vector<8x8xf32> to vector<8xf32>
    %27 = vector.shape_cast %26 : vector<8xf32> to vector<8x1xf32>
    %28 = tpu.reciprocal %27 {approx = true} : vector<8x1xf32> -> vector<8x1xf32>
    %29 = vector.broadcast %28 : vector<8x1xf32> to vector<8x8xf32>
    %30 = arith.mulf %25, %29 : vector<8x8xf32>
    %cst_14 = arith.constant dense<0.000000e+00> : vector<8x8xf32>
    %31 = tpu.matmul %30, %17, %cst_14 {dimension_numbers = #tpu.dot_dimension_numbers<[1], [0], [0], [1], [0, 0, 1, 1], [], []>} : vector<8x8xf32>, vector<8x8xf32>, vector<8x8xf32> -> vector<8x8xf32>
    %32 = vector.extract_strided_slice %8 {offsets = [0, 0], sizes = [8, 32], strides = [1, 1]} : vector<32x32xf32> to vector<8x32xf32>
    %cst_15 = arith.constant dense<0.000000e+00> : vector<8x32xf32>
    %33 = tpu.matmul %31, %32, %cst_15 {dimension_numbers = #tpu.dot_dimension_numbers<[1], [0], [0], [1], [0, 0, 1, 1], [], []>} : vector<8x8xf32>, vector<8x32xf32>, vector<8x32xf32> -> vector<8x32xf32>
    %34 = arith.addf %14, %33 : vector<8x32xf32>
    %35 = vector.extract_strided_slice %7 {offsets = [0, 8], sizes = [8, 8], strides = [1, 1]} : vector<16x96xf32> to vector<8x8xf32>
    %36 = vector.extract_strided_slice %7 {offsets = [0, 40], sizes = [8, 8], strides = [1, 1]} : vector<16x96xf32> to vector<8x8xf32>
    %37 = vector.extract_strided_slice %7 {offsets = [0, 72], sizes = [8, 8], strides = [1, 1]} : vector<16x96xf32> to vector<8x8xf32>
    %cst_16 = arith.constant dense<0.000000e+00> : vector<8x8xf32>
    %38 = tpu.matmul %35, %36, %cst_16 {dimension_numbers = #tpu.dot_dimension_numbers<[1], [1], [0], [0], [0, 0, 1, 0], [], []>} : vector<8x8xf32>, vector<8x8xf32>, vector<8x8xf32> -> vector<8x8xf32>
    %cst_17 = arith.constant 0.353553385 : f32
    %39 = vector.broadcast %cst_17 : f32 to vector<8x8xf32>
    %40 = arith.mulf %38, %39 : vector<8x8xf32>
    %cst_18 = arith.constant dense<0xFF800000> : vector<8xf32>
    %41 = vector.multi_reduction <maximumf>, %40, %cst_18 [1] : vector<8x8xf32> to vector<8xf32>
    %42 = vector.shape_cast %41 : vector<8xf32> to vector<8x1xf32>
    %43 = vector.broadcast %42 : vector<8x1xf32> to vector<8x8xf32>
    %44 = arith.subf %40, %43 : vector<8x8xf32>
    %45 = math.exp %44 : vector<8x8xf32>
    %cst_19 = arith.constant dense<0.000000e+00> : vector<8xf32>
    %46 = vector.multi_reduction <add>, %45, %cst_19 [1] : vector<8x8xf32> to vector<8xf32>
    %47 = vector.shape_cast %46 : vector<8xf32> to vector<8x1xf32>
    %48 = tpu.reciprocal %47 {approx = true} : vector<8x1xf32> -> vector<8x1xf32>
    %49 = vector.broadcast %48 : vector<8x1xf32> to vector<8x8xf32>
    %50 = arith.mulf %45, %49 : vector<8x8xf32>
    %cst_20 = arith.constant dense<0.000000e+00> : vector<8x8xf32>
    %51 = tpu.matmul %50, %37, %cst_20 {dimension_numbers = #tpu.dot_dimension_numbers<[1], [0], [0], [1], [0, 0, 1, 1], [], []>} : vector<8x8xf32>, vector<8x8xf32>, vector<8x8xf32> -> vector<8x8xf32>
    %52 = vector.extract_strided_slice %8 {offsets = [8, 0], sizes = [8, 32], strides = [1, 1]} : vector<32x32xf32> to vector<8x32xf32>
    %cst_21 = arith.constant dense<0.000000e+00> : vector<8x32xf32>
    %53 = tpu.matmul %51, %52, %cst_21 {dimension_numbers = #tpu.dot_dimension_numbers<[1], [0], [0], [1], [0, 0, 1, 1], [], []>} : vector<8x8xf32>, vector<8x32xf32>, vector<8x32xf32> -> vector<8x32xf32>
    %54 = arith.addf %34, %53 : vector<8x32xf32>
    %55 = vector.extract_strided_slice %7 {offsets = [0, 16], sizes = [8, 8], strides = [1, 1]} : vector<16x96xf32> to vector<8x8xf32>
    %56 = vector.extract_strided_slice %7 {offsets = [0, 48], sizes = [8, 8], strides = [1, 1]} : vector<16x96xf32> to vector<8x8xf32>
    %57 = vector.extract_strided_slice %7 {offsets = [0, 80], sizes = [8, 8], strides = [1, 1]} : vector<16x96xf32> to vector<8x8xf32>
    %cst_22 = arith.constant dense<0.000000e+00> : vector<8x8xf32>
    %58 = tpu.matmul %55, %56, %cst_22 {dimension_numbers = #tpu.dot_dimension_numbers<[1], [1], [0], [0], [0, 0, 1, 0], [], []>} : vector<8x8xf32>, vector<8x8xf32>, vector<8x8xf32> -> vector<8x8xf32>
    %cst_23 = arith.constant 0.353553385 : f32
    %59 = vector.broadcast %cst_23 : f32 to vector<8x8xf32>
    %60 = arith.mulf %58, %59 : vector<8x8xf32>
    %cst_24 = arith.constant dense<0xFF800000> : vector<8xf32>
    %61 = vector.multi_reduction <maximumf>, %60, %cst_24 [1] : vector<8x8xf32> to vector<8xf32>
    %62 = vector.shape_cast %61 : vector<8xf32> to vector<8x1xf32>
    %63 = vector.broadcast %62 : vector<8x1xf32> to vector<8x8xf32>
    %64 = arith.subf %60, %63 : vector<8x8xf32>
    %65 = math.exp %64 : vector<8x8xf32>
    %cst_25 = arith.constant dense<0.000000e+00> : vector<8xf32>
    %66 = vector.multi_reduction <add>, %65, %cst_25 [1] : vector<8x8xf32> to vector<8xf32>
    %67 = vector.shape_cast %66 : vector<8xf32> to vector<8x1xf32>
    %68 = tpu.reciprocal %67 {approx = true} : vector<8x1xf32> -> vector<8x1xf32>
    %69 = vector.broadcast %68 : vector<8x1xf32> to vector<8x8xf32>
    %70 = arith.mulf %65, %69 : vector<8x8xf32>
    %cst_26 = arith.constant dense<0.000000e+00> : vector<8x8xf32>
    %71 = tpu.matmul %70, %57, %cst_26 {dimension_numbers = #tpu.dot_dimension_numbers<[1], [0], [0], [1], [0, 0, 1, 1], [], []>} : vector<8x8xf32>, vector<8x8xf32>, vector<8x8xf32> -> vector<8x8xf32>
    %72 = vector.extract_strided_slice %8 {offsets = [16, 0], sizes = [8, 32], strides = [1, 1]} : vector<32x32xf32> to vector<8x32xf32>
    %cst_27 = arith.constant dense<0.000000e+00> : vector<8x32xf32>
    %73 = tpu.matmul %71, %72, %cst_27 {dimension_numbers = #tpu.dot_dimension_numbers<[1], [0], [0], [1], [0, 0, 1, 1], [], []>} : vector<8x8xf32>, vector<8x32xf32>, vector<8x32xf32> -> vector<8x32xf32>
    %74 = arith.addf %54, %73 : vector<8x32xf32>
    %75 = vector.extract_strided_slice %7 {offsets = [0, 24], sizes = [8, 8], strides = [1, 1]} : vector<16x96xf32> to vector<8x8xf32>
    %76 = vector.extract_strided_slice %7 {offsets = [0, 56], sizes = [8, 8], strides = [1, 1]} : vector<16x96xf32> to vector<8x8xf32>
    %77 = vector.extract_strided_slice %7 {offsets = [0, 88], sizes = [8, 8], strides = [1, 1]} : vector<16x96xf32> to vector<8x8xf32>
    %cst_28 = arith.constant dense<0.000000e+00> : vector<8x8xf32>
    %78 = tpu.matmul %75, %76, %cst_28 {dimension_numbers = #tpu.dot_dimension_numbers<[1], [1], [0], [0], [0, 0, 1, 0], [], []>} : vector<8x8xf32>, vector<8x8xf32>, vector<8x8xf32> -> vector<8x8xf32>
    %cst_29 = arith.constant 0.353553385 : f32
    %79 = vector.broadcast %cst_29 : f32 to vector<8x8xf32>
    %80 = arith.mulf %78, %79 : vector<8x8xf32>
    %cst_30 = arith.constant dense<0xFF800000> : vector<8xf32>
    %81 = vector.multi_reduction <maximumf>, %80, %cst_30 [1] : vector<8x8xf32> to vector<8xf32>
    %82 = vector.shape_cast %81 : vector<8xf32> to vector<8x1xf32>
    %83 = vector.broadcast %82 : vector<8x1xf32> to vector<8x8xf32>
    %84 = arith.subf %80, %83 : vector<8x8xf32>
    %85 = math.exp %84 : vector<8x8xf32>
    %cst_31 = arith.constant dense<0.000000e+00> : vector<8xf32>
    %86 = vector.multi_reduction <add>, %85, %cst_31 [1] : vector<8x8xf32> to vector<8xf32>
    %87 = vector.shape_cast %86 : vector<8xf32> to vector<8x1xf32>
    %88 = tpu.reciprocal %87 {approx = true} : vector<8x1xf32> -> vector<8x1xf32>
    %89 = vector.broadcast %88 : vector<8x1xf32> to vector<8x8xf32>
    %90 = arith.mulf %85, %89 : vector<8x8xf32>
    %cst_32 = arith.constant dense<0.000000e+00> : vector<8x8xf32>
    %91 = tpu.matmul %90, %77, %cst_32 {dimension_numbers = #tpu.dot_dimension_numbers<[1], [0], [0], [1], [0, 0, 1, 1], [], []>} : vector<8x8xf32>, vector<8x8xf32>, vector<8x8xf32> -> vector<8x8xf32>
    %92 = vector.extract_strided_slice %8 {offsets = [24, 0], sizes = [8, 32], strides = [1, 1]} : vector<32x32xf32> to vector<8x32xf32>
    %cst_33 = arith.constant dense<0.000000e+00> : vector<8x32xf32>
    %93 = tpu.matmul %91, %92, %cst_33 {dimension_numbers = #tpu.dot_dimension_numbers<[1], [0], [0], [1], [0, 0, 1, 1], [], []>} : vector<8x8xf32>, vector<8x32xf32>, vector<8x32xf32> -> vector<8x32xf32>
    %94 = arith.addf %74, %93 : vector<8x32xf32>
    %c0_34 = arith.constant 0 : index
    %c0_35 = arith.constant 0 : index
    %95 = vector.load %arg6[%c0_34, %c0_35] : memref<16x32xf32, #tpu.memory_space<vmem>>, vector<8x32xf32>
    tpu.vector_store %arg6[%c0_34, %c0_35], %94 {strides = array<i32>} : memref<16x32xf32, #tpu.memory_space<vmem>>, vector<8x32xf32>,
    %cst_36 = arith.constant 0.000000e+00 : f32
    %96 = vector.broadcast %cst_36 : f32 to vector<8x32xf32>
    %97 = vector.shape_cast %10 : vector<32xf32> to vector<1x32xf32>
    %98 = vector.broadcast %97 : vector<1x32xf32> to vector<8x32xf32>
    %99 = arith.addf %96, %98 : vector<8x32xf32>
    %100 = vector.extract_strided_slice %7 {offsets = [8, 0], sizes = [8, 8], strides = [1, 1]} : vector<16x96xf32> to vector<8x8xf32>
    %101 = vector.extract_strided_slice %7 {offsets = [8, 32], sizes = [8, 8], strides = [1, 1]} : vector<16x96xf32> to vector<8x8xf32>
    %102 = vector.extract_strided_slice %7 {offsets = [8, 64], sizes = [8, 8], strides = [1, 1]} : vector<16x96xf32> to vector<8x8xf32>
    %cst_37 = arith.constant dense<0.000000e+00> : vector<8x8xf32>
    %103 = tpu.matmul %100, %101, %cst_37 {dimension_numbers = #tpu.dot_dimension_numbers<[1], [1], [0], [0], [0, 0, 1, 0], [], []>} : vector<8x8xf32>, vector<8x8xf32>, vector<8x8xf32> -> vector<8x8xf32>
    %cst_38 = arith.constant 0.353553385 : f32
    %104 = vector.broadcast %cst_38 : f32 to vector<8x8xf32>
    %105 = arith.mulf %103, %104 : vector<8x8xf32>
    %cst_39 = arith.constant dense<0xFF800000> : vector<8xf32>
    %106 = vector.multi_reduction <maximumf>, %105, %cst_39 [1] : vector<8x8xf32> to vector<8xf32>
    %107 = vector.shape_cast %106 : vector<8xf32> to vector<8x1xf32>
    %108 = vector.broadcast %107 : vector<8x1xf32> to vector<8x8xf32>
    %109 = arith.subf %105, %108 : vector<8x8xf32>
    %110 = math.exp %109 : vector<8x8xf32>
    %cst_40 = arith.constant dense<0.000000e+00> : vector<8xf32>
    %111 = vector.multi_reduction <add>, %110, %cst_40 [1] : vector<8x8xf32> to vector<8xf32>
    %112 = vector.shape_cast %111 : vector<8xf32> to vector<8x1xf32>
    %113 = tpu.reciprocal %112 {approx = true} : vector<8x1xf32> -> vector<8x1xf32>
    %114 = vector.broadcast %113 : vector<8x1xf32> to vector<8x8xf32>
    %115 = arith.mulf %110, %114 : vector<8x8xf32>
    %cst_41 = arith.constant dense<0.000000e+00> : vector<8x8xf32>
    %116 = tpu.matmul %115, %102, %cst_41 {dimension_numbers = #tpu.dot_dimension_numbers<[1], [0], [0], [1], [0, 0, 1, 1], [], []>} : vector<8x8xf32>, vector<8x8xf32>, vector<8x8xf32> -> vector<8x8xf32>
    %117 = vector.extract_strided_slice %8 {offsets = [0, 0], sizes = [8, 32], strides = [1, 1]} : vector<32x32xf32> to vector<8x32xf32>
    %cst_42 = arith.constant dense<0.000000e+00> : vector<8x32xf32>
    %118 = tpu.matmul %116, %117, %cst_42 {dimension_numbers = #tpu.dot_dimension_numbers<[1], [0], [0], [1], [0, 0, 1, 1], [], []>} : vector<8x8xf32>, vector<8x32xf32>, vector<8x32xf32> -> vector<8x32xf32>
    %119 = arith.addf %99, %118 : vector<8x32xf32>
    %120 = vector.extract_strided_slice %7 {offsets = [8, 8], sizes = [8, 8], strides = [1, 1]} : vector<16x96xf32> to vector<8x8xf32>
    %121 = vector.extract_strided_slice %7 {offsets = [8, 40], sizes = [8, 8], strides = [1, 1]} : vector<16x96xf32> to vector<8x8xf32>
    %122 = vector.extract_strided_slice %7 {offsets = [8, 72], sizes = [8, 8], strides = [1, 1]} : vector<16x96xf32> to vector<8x8xf32>
    %cst_43 = arith.constant dense<0.000000e+00> : vector<8x8xf32>
    %123 = tpu.matmul %120, %121, %cst_43 {dimension_numbers = #tpu.dot_dimension_numbers<[1], [1], [0], [0], [0, 0, 1, 0], [], []>} : vector<8x8xf32>, vector<8x8xf32>, vector<8x8xf32> -> vector<8x8xf32>
    %cst_44 = arith.constant 0.353553385 : f32
    %124 = vector.broadcast %cst_44 : f32 to vector<8x8xf32>
    %125 = arith.mulf %123, %124 : vector<8x8xf32>
    %cst_45 = arith.constant dense<0xFF800000> : vector<8xf32>
    %126 = vector.multi_reduction <maximumf>, %125, %cst_45 [1] : vector<8x8xf32> to vector<8xf32>
    %127 = vector.shape_cast %126 : vector<8xf32> to vector<8x1xf32>
    %128 = vector.broadcast %127 : vector<8x1xf32> to vector<8x8xf32>
    %129 = arith.subf %125, %128 : vector<8x8xf32>
    %130 = math.exp %129 : vector<8x8xf32>
    %cst_46 = arith.constant dense<0.000000e+00> : vector<8xf32>
    %131 = vector.multi_reduction <add>, %130, %cst_46 [1] : vector<8x8xf32> to vector<8xf32>
    %132 = vector.shape_cast %131 : vector<8xf32> to vector<8x1xf32>
    %133 = tpu.reciprocal %132 {approx = true} : vector<8x1xf32> -> vector<8x1xf32>
    %134 = vector.broadcast %133 : vector<8x1xf32> to vector<8x8xf32>
    %135 = arith.mulf %130, %134 : vector<8x8xf32>
    %cst_47 = arith.constant dense<0.000000e+00> : vector<8x8xf32>
    %136 = tpu.matmul %135, %122, %cst_47 {dimension_numbers = #tpu.dot_dimension_numbers<[1], [0], [0], [1], [0, 0, 1, 1], [], []>} : vector<8x8xf32>, vector<8x8xf32>, vector<8x8xf32> -> vector<8x8xf32>
    %137 = vector.extract_strided_slice %8 {offsets = [8, 0], sizes = [8, 32], strides = [1, 1]} : vector<32x32xf32> to vector<8x32xf32>
    %cst_48 = arith.constant dense<0.000000e+00> : vector<8x32xf32>
    %138 = tpu.matmul %136, %137, %cst_48 {dimension_numbers = #tpu.dot_dimension_numbers<[1], [0], [0], [1], [0, 0, 1, 1], [], []>} : vector<8x8xf32>, vector<8x32xf32>, vector<8x32xf32> -> vector<8x32xf32>
    %139 = arith.addf %119, %138 : vector<8x32xf32>
    %140 = vector.extract_strided_slice %7 {offsets = [8, 16], sizes = [8, 8], strides = [1, 1]} : vector<16x96xf32> to vector<8x8xf32>
    %141 = vector.extract_strided_slice %7 {offsets = [8, 48], sizes = [8, 8], strides = [1, 1]} : vector<16x96xf32> to vector<8x8xf32>
    %142 = vector.extract_strided_slice %7 {offsets = [8, 80], sizes = [8, 8], strides = [1, 1]} : vector<16x96xf32> to vector<8x8xf32>
    %cst_49 = arith.constant dense<0.000000e+00> : vector<8x8xf32>
    %143 = tpu.matmul %140, %141, %cst_49 {dimension_numbers = #tpu.dot_dimension_numbers<[1], [1], [0], [0], [0, 0, 1, 0], [], []>} : vector<8x8xf32>, vector<8x8xf32>, vector<8x8xf32> -> vector<8x8xf32>
    %cst_50 = arith.constant 0.353553385 : f32
    %144 = vector.broadcast %cst_50 : f32 to vector<8x8xf32>
    %145 = arith.mulf %143, %144 : vector<8x8xf32>
    %cst_51 = arith.constant dense<0xFF800000> : vector<8xf32>
    %146 = vector.multi_reduction <maximumf>, %145, %cst_51 [1] : vector<8x8xf32> to vector<8xf32>
    %147 = vector.shape_cast %146 : vector<8xf32> to vector<8x1xf32>
    %148 = vector.broadcast %147 : vector<8x1xf32> to vector<8x8xf32>
    %149 = arith.subf %145, %148 : vector<8x8xf32>
    %150 = math.exp %149 : vector<8x8xf32>
    %cst_52 = arith.constant dense<0.000000e+00> : vector<8xf32>
    %151 = vector.multi_reduction <add>, %150, %cst_52 [1] : vector<8x8xf32> to vector<8xf32>
    %152 = vector.shape_cast %151 : vector<8xf32> to vector<8x1xf32>
    %153 = tpu.reciprocal %152 {approx = true} : vector<8x1xf32> -> vector<8x1xf32>
    %154 = vector.broadcast %153 : vector<8x1xf32> to vector<8x8xf32>
    %155 = arith.mulf %150, %154 : vector<8x8xf32>
    %cst_53 = arith.constant dense<0.000000e+00> : vector<8x8xf32>
    %156 = tpu.matmul %155, %142, %cst_53 {dimension_numbers = #tpu.dot_dimension_numbers<[1], [0], [0], [1], [0, 0, 1, 1], [], []>} : vector<8x8xf32>, vector<8x8xf32>, vector<8x8xf32> -> vector<8x8xf32>
    %157 = vector.extract_strided_slice %8 {offsets = [16, 0], sizes = [8, 32], strides = [1, 1]} : vector<32x32xf32> to vector<8x32xf32>
    %cst_54 = arith.constant dense<0.000000e+00> : vector<8x32xf32>
    %158 = tpu.matmul %156, %157, %cst_54 {dimension_numbers = #tpu.dot_dimension_numbers<[1], [0], [0], [1], [0, 0, 1, 1], [], []>} : vector<8x8xf32>, vector<8x32xf32>, vector<8x32xf32> -> vector<8x32xf32>
    %159 = arith.addf %139, %158 : vector<8x32xf32>
    %160 = vector.extract_strided_slice %7 {offsets = [8, 24], sizes = [8, 8], strides = [1, 1]} : vector<16x96xf32> to vector<8x8xf32>
    %161 = vector.extract_strided_slice %7 {offsets = [8, 56], sizes = [8, 8], strides = [1, 1]} : vector<16x96xf32> to vector<8x8xf32>
    %162 = vector.extract_strided_slice %7 {offsets = [8, 88], sizes = [8, 8], strides = [1, 1]} : vector<16x96xf32> to vector<8x8xf32>
    %cst_55 = arith.constant dense<0.000000e+00> : vector<8x8xf32>
    %163 = tpu.matmul %160, %161, %cst_55 {dimension_numbers = #tpu.dot_dimension_numbers<[1], [1], [0], [0], [0, 0, 1, 0], [], []>} : vector<8x8xf32>, vector<8x8xf32>, vector<8x8xf32> -> vector<8x8xf32>
    %cst_56 = arith.constant 0.353553385 : f32
    %164 = vector.broadcast %cst_56 : f32 to vector<8x8xf32>
    %165 = arith.mulf %163, %164 : vector<8x8xf32>
    %cst_57 = arith.constant dense<0xFF800000> : vector<8xf32>
    %166 = vector.multi_reduction <maximumf>, %165, %cst_57 [1] : vector<8x8xf32> to vector<8xf32>
    %167 = vector.shape_cast %166 : vector<8xf32> to vector<8x1xf32>
    %168 = vector.broadcast %167 : vector<8x1xf32> to vector<8x8xf32>
    %169 = arith.subf %165, %168 : vector<8x8xf32>
    %170 = math.exp %169 : vector<8x8xf32>
    %cst_58 = arith.constant dense<0.000000e+00> : vector<8xf32>
    %171 = vector.multi_reduction <add>, %170, %cst_58 [1] : vector<8x8xf32> to vector<8xf32>
    %172 = vector.shape_cast %171 : vector<8xf32> to vector<8x1xf32>
    %173 = tpu.reciprocal %172 {approx = true} : vector<8x1xf32> -> vector<8x1xf32>
    %174 = vector.broadcast %173 : vector<8x1xf32> to vector<8x8xf32>
    %175 = arith.mulf %170, %174 : vector<8x8xf32>
    %cst_59 = arith.constant dense<0.000000e+00> : vector<8x8xf32>
    %176 = tpu.matmul %175, %162, %cst_59 {dimension_numbers = #tpu.dot_dimension_numbers<[1], [0], [0], [1], [0, 0, 1, 1], [], []>} : vector<8x8xf32>, vector<8x8xf32>, vector<8x8xf32> -> vector<8x8xf32>
    %177 = vector.extract_strided_slice %8 {offsets = [24, 0], sizes = [8, 32], strides = [1, 1]} : vector<32x32xf32> to vector<8x32xf32>
    %cst_60 = arith.constant dense<0.000000e+00> : vector<8x32xf32>
    %178 = tpu.matmul %176, %177, %cst_60 {dimension_numbers = #tpu.dot_dimension_numbers<[1], [0], [0], [1], [0, 0, 1, 1], [], []>} : vector<8x8xf32>, vector<8x32xf32>, vector<8x32xf32> -> vector<8x32xf32>
    %179 = arith.addf %159, %178 : vector<8x32xf32>
    %c8 = arith.constant 8 : index
    %c0_61 = arith.constant 0 : index
    %180 = vector.load %arg6[%c8, %c0_61] : memref<16x32xf32, #tpu.memory_space<vmem>>, vector<8x32xf32>
    tpu.vector_store %arg6[%c8, %c0_61], %179 {strides = array<i32>} : memref<16x32xf32, #tpu.memory_space<vmem>>, vector<8x32xf32>,
    return
  }
  func.func @transform_0(%arg0: i32) -> (i32, i32) {
    %c0_i32 = arith.constant 0 : i32
    %c0_i32_0 = arith.constant 0 : i32
    %c0_i32_1 = arith.constant 0 : i32
    return %c0_i32, %c0_i32_0 : i32, i32
  }
  func.func @transform_1(%arg0: i32) -> (i32, i32) {
    %c0_i32 = arith.constant 0 : i32
    %c0_i32_0 = arith.constant 0 : i32
    %c0_i32_1 = arith.constant 0 : i32
    return %c0_i32, %c0_i32_0 : i32, i32
  }
  func.func @transform_2(%arg0: i32) -> (i32, i32) {
    %c0_i32 = arith.constant 0 : i32
    %c0_i32_0 = arith.constant 0 : i32
    %c0_i32_1 = arith.constant 0 : i32
    return %c0_i32, %c0_i32_0 : i32, i32
  }
  func.func @transform_3(%arg0: i32) -> (i32, i32) {
    %c0_i32 = arith.constant 0 : i32
    %c0_i32_0 = arith.constant 0 : i32
    %c0_i32_1 = arith.constant 0 : i32
    return %c0_i32, %c0_i32_0 : i32, i32
  }
  func.func @transform_4(%arg0: i32) -> (i32, i32) {
    %c0_i32 = arith.constant 0 : i32
    %c0_i32_0 = arith.constant 0 : i32
    %c0_i32_1 = arith.constant 0 : i32
    return %c0_i32, %c0_i32_0 : i32, i32
  }
  func.func @transform_5(%arg0: i32) -> (i32, i32) {
    %c0_i32 = arith.constant 0 : i32
    %c0_i32_0 = arith.constant 0 : i32
    %c0_i32_1 = arith.constant 0 : i32
    return %c0_i32, %c0_i32_0 : i32, i32
  }
}

</mosaic_0001>

<llo_original>
// kernel: tpu_custom_call.1
$region0: #{tpu_custom_call.1}
  #allocation0 [shape = 'u32[]', space=smem, size = 0x4, offset = 0x4, fixed_abs, tag = 'smem constant byte address 0x4 - core index']
  #allocation1 [shape = 'u32[144,128]{1,0:T(1,128)}', space=vmem, size = 0x12000, scoped, tag = 'internal scratch']
  %s0 = inlined_call_operand.hbm [shape: f32[16,32], index: 0, kind: input, shape index: {}]
  %s1 = inlined_call_operand.hbm [shape: f32[32,96], index: 1, kind: input, shape index: {}]
  %s2 = inlined_call_operand.vmem [shape: f32[1,96], index: 2, kind: input, shape index: {}]
  %s3 = inlined_call_operand.hbm [shape: f32[32,32], index: 3, kind: input, shape index: {}]
  %s4 = inlined_call_operand.vmem [shape: f32[1,32], index: 4, kind: input, shape index: {}]
  %s5 = inlined_call_operand.hbm [shape: f32[16,32], index: 5, kind: output, shape index: {}]
  %s6 = sld [smem:[#allocation0]]
  $region42: #{tpu_custom_call.1} parent=0
    _
  %s8 = ssub.s32 1, %s6
  %s9 = scalar_select 0, %s8, %s6
  $region1: #{tpu_custom_call.1} parent=0
    #allocation2 [shape = 'u8[8192]{0}', space=vmem, size = 0x2000, scoped, tag = 'input window, operand 0, single buffered']
    #allocation3 [shape = 's32[1]{0}', space=sflag, size = 0x4, scoped, tag = 'scoped memory for tpu_custom_call.1']
    #allocation4 [shape = 's32[1]{0}', space=sflag, size = 0x4, scoped, tag = 'scoped memory for tpu_custom_call.1']
    #allocation5 [shape = 'u8[16384]{0}', space=vmem, size = 0x4000, scoped, tag = 'input window, operand 1, single buffered']
    #allocation6 [shape = 's32[1]{0}', space=sflag, size = 0x4, scoped, tag = 'scoped memory for tpu_custom_call.1']
    #allocation7 [shape = 'u8[16384]{0}', space=vmem, size = 0x4000, scoped, tag = 'input window, operand 3, single buffered']
    #allocation8 [shape = 'u8[8192]{0}', space=vmem, size = 0x2000, scoped, tag = 'output window, operand 0, single buffered']
    %10 = vsyncpa [#allocation3], 0
    %11 = vsyncpa [#allocation6], 0
    %12 = vsyncpa [#allocation4], 0
    // Predicated region
    $region2: #{tpu_custom_call.1} parent=1 // pred_check
      _
    $region3: #{tpu_custom_call.1} parent=1 // pred_check_branch
      %14 = sbr.rel (0) target = $region5
    $region4: #{tpu_custom_call.1} parent=1 // pred_region
      %s16 = ssub.s32 256, 256
      %17 = vsyncadd [#allocation3], %s16
      %s18 = sshll.u32 [#allocation2], 4
      %s19 = int_to_ptr.vmem [resolvable:$true] %s18
      %24 = dma.hbm_to_vmem [thread:$0]  %s0, 256, %s19, [#allocation3], 128, 128, 8
    $region5: #{tpu_custom_call.1} parent=1 // pred_fallthru
      _
    // Predicated region
    $region6: #{tpu_custom_call.1} parent=1 // pred_check
      _
    $region7: #{tpu_custom_call.1} parent=1 // pred_check_branch
      %26 = sbr.rel (0) target = $region9
    $region8: #{tpu_custom_call.1} parent=1 // pred_region
      %s28 = ssub.s32 512, 512
      %29 = vsyncadd [#allocation6], %s28
      %s30 = sshll.u32 [#allocation5], 4
      %s31 = int_to_ptr.vmem [resolvable:$true] %s30
      %36 = dma.hbm_to_vmem [thread:$0]  %s1, 512, %s31, [#allocation6], 128, 128, 8
    $region9: #{tpu_custom_call.1} parent=1 // pred_fallthru
      _
    // Predicated region
    $region10: #{tpu_custom_call.1} parent=1 // pred_check
      _
    $region11: #{tpu_custom_call.1} parent=1 // pred_check_branch
      %38 = sbr.rel (0) target = $region13
    $region12: #{tpu_custom_call.1} parent=1 // pred_region
      _
    $region13: #{tpu_custom_call.1} parent=1 // pred_fallthru
      _
    // Predicated region
    $region14: #{tpu_custom_call.1} parent=1 // pred_check
      _
    $region15: #{tpu_custom_call.1} parent=1 // pred_check_branch
      %40 = sbr.rel (0) target = $region17
    $region16: #{tpu_custom_call.1} parent=1 // pred_region
      %s42 = ssub.s32 512, 512
      %43 = vsyncadd [#allocation6], %s42
      %s44 = sshll.u32 [#allocation7], 4
      %s45 = int_to_ptr.vmem [resolvable:$true] %s44
      %50 = dma.hbm_to_vmem [thread:$0]  %s3, 512, %s45, [#allocation6], 128, 128, 8
    $region17: #{tpu_custom_call.1} parent=1 // pred_fallthru
      _
    // Predicated region
    $region18: #{tpu_custom_call.1} parent=1 // pred_check
      _
    $region19: #{tpu_custom_call.1} parent=1 // pred_check_branch
      %52 = sbr.rel (0) target = $region21
    $region20: #{tpu_custom_call.1} parent=1 // pred_region
      _
    $region21: #{tpu_custom_call.1} parent=1 // pred_fallthru
      _
    // Predicated region
    $region22: #{tpu_custom_call.1} parent=1 // pred_check
      _
    $region23: #{tpu_custom_call.1} parent=1 // pred_check_branch
      %54 = sbr.rel (0) target = $region25
    $region24: #{tpu_custom_call.1} parent=1 // pred_region
      %55 = dma.done [#allocation3], 256
    $region25: #{tpu_custom_call.1} parent=1 // pred_fallthru
      _
    // Predicated region
    $region26: #{tpu_custom_call.1} parent=1 // pred_check
      _
    $region27: #{tpu_custom_call.1} parent=1 // pred_check_branch
      %57 = sbr.rel (0) target = $region29
    $region28: #{tpu_custom_call.1} parent=1 // pred_region
      %58 = dma.done [#allocation6], 512
    $region29: #{tpu_custom_call.1} parent=1 // pred_fallthru
      _
    // Predicated region
    $region30: #{tpu_custom_call.1} parent=1 // pred_check
      _
    $region31: #{tpu_custom_call.1} parent=1 // pred_check_branch
      %60 = sbr.rel (0) target = $region33
    $region32: #{tpu_custom_call.1} parent=1 // pred_region
      %61 = dma.done [#allocation6], 512
    $region33: #{tpu_custom_call.1} parent=1 // pred_fallthru
      _
    %v62 = vld [vmem:[#allocation2] sm:$0xff]
    %v63 = vld [vmem:[#allocation2 + $0x8] sm:$0xff]
    %v64 = vld [vmem:[#allocation5] sm:$0xff]
    %v65 = vld [vmem:[#allocation5 + $0x8] sm:$0xff]
    %v66 = vld [vmem:[#allocation5 + $0x10] sm:$0xff]
    %v67 = vld [vmem:[#allocation5 + $0x18] sm:$0xff]
    %v68 = vld [vmem:[%s2] sm:$0x1]
    %v70 = vlaneseq
    %v71 = vshrl.u32 %v70, 7
    %v72 = vsub.s32 0, %v71
    %v73 = vrot.slane %v68, %v72
    %vm75 = vcmask 261120
    %v77 = vsel %vm75, %v62, 0
    %v80 = vsel %vm75, %v63, 0
    %82 = vmatprep.subr.mxu0 0.0
    %83 = vmatpush1.msra.mxu0 %v64
    %84 = vmatprep.subr.mxu0 0.0
    %85 = vmatpush1.msra.mxu0 %v65
    %86 = vmatprep.subr.mxu0 0.0
    %87 = vmatpush1.msra.mxu0 %v66
    %88 = vmatprep.subr.mxu0 0.0
    %89 = vmatpush1.msra.mxu0 %v67
    %90 = vmatprep.subr.mxu0 0.0
    %91 = vmatpush1.msra.mxu0 0.0
    %92 = vmatprep.subr.mxu0 0.0
    %93 = vmatpush1.msra.mxu0 0.0
    %94 = vmatprep.subr.mxu0 0.0
    %95 = vmatpush1.msra.mxu0 0.0
    %96 = vmatprep.subr.mxu0 0.0
    %97 = vmatpush1.msra.mxu0 0.0
    %98 = vmatprep.subr.mxu0 0.0
    %99 = vmatpush1.msra.mxu0 0.0
    %100 = vmatprep.subr.mxu0 0.0
    %101 = vmatpush1.msra.mxu0 0.0
    %102 = vmatprep.subr.mxu0 0.0
    %103 = vmatpush1.msra.mxu0 0.0
    %104 = vmatprep.subr.mxu0 0.0
    %105 = vmatpush1.msra.mxu0 0.0
    %106 = vmatprep.subr.mxu0 0.0
    %107 = vmatpush1.msra.mxu0 0.0
    %108 = vmatprep.subr.mxu0 0.0
    %109 = vmatpush1.msra.mxu0 0.0
    %110 = vmatprep.subr.mxu0 0.0
    %111 = vmatpush1.msra.mxu0 0.0
    %112 = vmatprep.subr.mxu0 0.0
    %113 = vmatpush1.msra.mxu0 0.0
    %114 = vmatprep.subr.mxu0 0.0
    %115 = vmatpush1.msra.mxu0 0.0
    %116 = vmatprep.subr.mxu0 0.0
    %117 = vmatpush1.msra.mxu0 0.0
    %118 = vmatprep.subr.mxu0 0.0
    %119 = vmatpush1.msra.mxu0 0.0
    %120 = vmatprep.subr.mxu0 0.0
    %121 = vmatpush1.msra.mxu0 0.0
    %122 = vmatprep.subr.mxu0 0.0
    %123 = vmatpush1.msra.mxu0 0.0
    %124 = vmatprep.subr.mxu0 0.0
    %125 = vmatpush1.msra.mxu0 0.0
    %126 = vmatprep.subr.mxu0 0.0
    %127 = vmatpush1.msra.mxu0 0.0
    %128 = vmatprep.subr.mxu0 0.0
    %129 = vmatpush1.msra.mxu0 0.0
    %130 = vmatprep.subr.mxu0 0.0
    %131 = vmatpush1.msra.mxu0 0.0
    %132 = vmatprep.subr.mxu0 0.0
    %133 = vmatpush1.msra.mxu0 0.0
    %134 = vmatprep.subr.mxu0 0.0
    %135 = vmatpush1.msra.mxu0 0.0
    %136 = vmatprep.subr.mxu0 0.0
    %137 = vmatpush1.msra.mxu0 0.0
    %138 = vmatprep.subr.mxu0 0.0
    %139 = vmatpush1.msra.mxu0 0.0
    %140 = vmatprep.subr.mxu0 0.0
    %141 = vmatpush1.msra.mxu0 0.0
    %142 = vmatprep.subr.mxu0 0.0
    %143 = vmatpush1.msra.mxu0 0.0
    %144 = vmatprep.subr.mxu0 0.0
    %145 = vmatpush1.msra.mxu0 0.0
    %146 = vmatprep.mubr.f32.mxu0 0.0
    %147 = vmatmul.mubr.f32.gmra.mrb[0].mxu0 %v77
    %v148 = vpop.f32.mrb[0].mxu0
    %v149 = vadd.f32 %v73, %v148
    %v150 = vpop.f32.mrb[0].mxu0
    %151 = vmatprep.mubr.f32.mxu0 0.0
    %152 = vmatmul.mubr.f32.gmra.mrb[0].mxu0 %v80
    %v153 = vpop.f32.mrb[0].mxu0
    %v154 = vadd.f32 %v73, %v153
    %v155 = vpop.f32.mrb[0].mxu0
    %156 = vdwg.mxu0
    %v157 = vld [vmem:[#allocation7] sm:$0xff]
    %v158 = vld [vmem:[#allocation7 + $0x8] sm:$0xff]
    %v159 = vld [vmem:[#allocation7 + $0x10] sm:$0xff]
    %v160 = vld [vmem:[#allocation7 + $0x18] sm:$0xff]
    %v161 = vld [vmem:[%s4] sm:$0x1]
    %v163 = vlaneseq
    %v164 = vshrl.u32 %v163, 7
    %v165 = vsub.s32 0, %v164
    %v166 = vrot.slane %v161, %v165
    %v168 = vadd.f32 %v166, 0.0
    %170 = vrot.lane.b32.xlu0 %v149, 96
    %v171 = vpop.permute.xlu0 %170
    %vm172 = vcmask 64512
    %v173 = vsel %vm172, %v149, 0
    %v175 = vsel %vm172, %v171, 0
    %177 = vmatprep.subr.mxu0 0.0
    %178 = vmatpush1.xpose.msra.mxu0 %v175
    %179 = vmatprep.subr.mxu0 0.0
    %180 = vmatpush1.xpose.msra.mxu0 0.0
    %181 = vmatprep.subr.mxu0 0.0
    %182 = vmatpush1.xpose.msra.mxu0 0.0
    %183 = vmatprep.subr.mxu0 0.0
    %184 = vmatpush1.xpose.msra.mxu0 0.0
    %185 = vmatprep.subr.mxu0 0.0
    %186 = vmatpush1.xpose.msra.mxu0 0.0
    %187 = vmatprep.subr.mxu0 0.0
    %188 = vmatpush1.xpose.msra.mxu0 0.0
    %189 = vmatprep.subr.mxu0 0.0
    %190 = vmatpush1.xpose.msra.mxu0 0.0
    %191 = vmatprep.subr.mxu0 0.0
    %192 = vmatpush1.xpose.msra.mxu0 0.0
    %193 = vmatprep.subr.mxu0 0.0
    %194 = vmatpush1.xpose.msra.mxu0 0.0
    %195 = vmatprep.subr.mxu0 0.0
    %196 = vmatpush1.xpose.msra.mxu0 0.0
    %197 = vmatprep.subr.mxu0 0.0
    %198 = vmatpush1.xpose.msra.mxu0 0.0
    %199 = vmatprep.subr.mxu0 0.0
    %200 = vmatpush1.xpose.msra.mxu0 0.0
    %201 = vmatprep.subr.mxu0 0.0
    %202 = vmatpush1.xpose.msra.mxu0 0.0
    %203 = vmatprep.subr.mxu0 0.0
    %204 = vmatpush1.xpose.msra.mxu0 0.0
    %205 = vmatprep.subr.mxu0 0.0
    %206 = vmatpush1.xpose.msra.mxu0 0.0
    %207 = vmatprep.subr.mxu0 0.0
    %208 = vmatpush1.xpose.msra.mxu0 0.0
    %209 = vmatprep.subr.mxu0 0.0
    %210 = vmatpush1.xpose.msra.mxu0 0.0
    %211 = vmatprep.subr.mxu0 0.0
    %212 = vmatpush1.xpose.msra.mxu0 0.0
    %213 = vmatprep.subr.mxu0 0.0
    %214 = vmatpush1.xpose.msra.mxu0 0.0
    %215 = vmatprep.subr.mxu0 0.0
    %216 = vmatpush1.xpose.msra.mxu0 0.0
    %217 = vmatprep.subr.mxu0 0.0
    %218 = vmatpush1.xpose.msra.mxu0 0.0
    %219 = vmatprep.subr.mxu0 0.0
    %220 = vmatpush1.xpose.msra.mxu0 0.0
    %221 = vmatprep.subr.mxu0 0.0
    %222 = vmatpush1.xpose.msra.mxu0 0.0
    %223 = vmatprep.subr.mxu0 0.0
    %224 = vmatpush1.xpose.msra.mxu0 0.0
    %225 = vmatprep.subr.mxu0 0.0
    %226 = vmatpush1.xpose.msra.mxu0 0.0
    %227 = vmatprep.subr.mxu0 0.0
    %228 = vmatpush1.xpose.msra.mxu0 0.0
    %229 = vmatprep.subr.mxu0 0.0
    %230 = vmatpush1.xpose.msra.mxu0 0.0
    %231 = vmatprep.subr.mxu0 0.0
    %232 = vmatpush1.xpose.msra.mxu0 0.0
    %233 = vmatprep.subr.mxu0 0.0
    %234 = vmatpush1.xpose.msra.mxu0 0.0
    %235 = vmatprep.subr.mxu0 0.0
    %236 = vmatpush1.xpose.msra.mxu0 0.0
    %237 = vmatprep.subr.mxu0 0.0
    %238 = vmatpush1.xpose.msra.mxu0 0.0
    %239 = vmatprep.subr.mxu0 0.0
    %240 = vmatpush1.xpose.msra.mxu0 0.0
    %241 = vmatprep.mubr.f32.mxu0 0.0
    %242 = vmatmul.mubr.f32.gmra.mrb[0].mxu0 %v173
    %v243 = vpop.f32.mrb[0].mxu0
    %v244 = vadd.f32 0.0, %v243
    %v245 = vpop.f32.mrb[0].mxu0
    %246 = vdwg.mxu0
    %v247 = vmul.f32 %v244, 0.35355338
    %v248 = vsel %vm172, %v247, -inf
    %249 = vmax.xlane.f32.xlu0 %v248
    %v250 = vpop.xlane.xlu0 %249
    %v251 = vsub.f32 %v247, %v250
    %v252 = vmul.f32 %v251, 1.442695
    %v253 = vpow.pop %v252
    %v254 = vsel %vm172, %v253, 0.0
    %255 = vadd.xlane.f32.xlu0 %v254
    %v256 = vpop.xlane.xlu0 %255
    %v257 = vrcp.pop %v256
    %v258 = vmul.f32 %v253, %v257
    %259 = vrot.lane.b32.xlu0 %v149, 64
    %v260 = vpop.permute.xlu0 %259
    %v263 = vsel %vm172, %v258, 0
    %265 = vmatprep.subr.mxu0 0.0
    %266 = vmatpush1.msra.mxu0 %v260
    %267 = vmatprep.subr.mxu0 0.0
    %268 = vmatpush1.msra.mxu0 0.0
    %269 = vmatprep.subr.mxu0 0.0
    %270 = vmatpush1.msra.mxu0 0.0
    %271 = vmatprep.subr.mxu0 0.0
    %272 = vmatpush1.msra.mxu0 0.0
    %273 = vmatprep.subr.mxu0 0.0
    %274 = vmatpush1.msra.mxu0 0.0
    %275 = vmatprep.subr.mxu0 0.0
    %276 = vmatpush1.msra.mxu0 0.0
    %277 = vmatprep.subr.mxu0 0.0
    %278 = vmatpush1.msra.mxu0 0.0
    %279 = vmatprep.subr.mxu0 0.0
    %280 = vmatpush1.msra.mxu0 0.0
    %281 = vmatprep.subr.mxu0 0.0
    %282 = vmatpush1.msra.mxu0 0.0
    %283 = vmatprep.subr.mxu0 0.0
    %284 = vmatpush1.msra.mxu0 0.0
    %285 = vmatprep.subr.mxu0 0.0
    %286 = vmatpush1.msra.mxu0 0.0
    %287 = vmatprep.subr.mxu0 0.0
    %288 = vmatpush1.msra.mxu0 0.0
    %289 = vmatprep.subr.mxu0 0.0
    %290 = vmatpush1.msra.mxu0 0.0
    %291 = vmatprep.subr.mxu0 0.0
    %292 = vmatpush1.msra.mxu0 0.0
    %293 = vmatprep.subr.mxu0 0.0
    %294 = vmatpush1.msra.mxu0 0.0
    %295 = vmatprep.subr.mxu0 0.0
    %296 = vmatpush1.msra.mxu0 0.0
    %297 = vmatprep.subr.mxu0 0.0
    %298 = vmatpush1.msra.mxu0 0.0
    %299 = vmatprep.subr.mxu0 0.0
    %300 = vmatpush1.msra.mxu0 0.0
    %301 = vmatprep.subr.mxu0 0.0
    %302 = vmatpush1.msra.mxu0 0.0
    %303 = vmatprep.subr.mxu0 0.0
    %304 = vmatpush1.msra.mxu0 0.0
    %305 = vmatprep.subr.mxu0 0.0
    %306 = vmatpush1.msra.mxu0 0.0
    %307 = vmatprep.subr.mxu0 0.0
    %308 = vmatpush1.msra.mxu0 0.0
    %309 = vmatprep.subr.mxu0 0.0
    %310 = vmatpush1.msra.mxu0 0.0
    %311 = vmatprep.subr.mxu0 0.0
    %312 = vmatpush1.msra.mxu0 0.0
    %313 = vmatprep.subr.mxu0 0.0
    %314 = vmatpush1.msra.mxu0 0.0
    %315 = vmatprep.subr.mxu0 0.0
    %316 = vmatpush1.msra.mxu0 0.0
    %317 = vmatprep.subr.mxu0 0.0
    %318 = vmatpush1.msra.mxu0 0.0
    %319 = vmatprep.subr.mxu0 0.0
    %320 = vmatpush1.msra.mxu0 0.0
    %321 = vmatprep.subr.mxu0 0.0
    %322 = vmatpush1.msra.mxu0 0.0
    %323 = vmatprep.subr.mxu0 0.0
    %324 = vmatpush1.msra.mxu0 0.0
    %325 = vmatprep.subr.mxu0 0.0
    %326 = vmatpush1.msra.mxu0 0.0
    %327 = vmatprep.subr.mxu0 0.0
    %328 = vmatpush1.msra.mxu0 0.0
    %329 = vmatprep.mubr.f32.mxu0 0.0
    %330 = vmatmul.mubr.f32.gmra.mrb[0].mxu0 %v263
    %v331 = vpop.f32.mrb[0].mxu0
    %v332 = vadd.f32 0.0, %v331
    %v333 = vpop.f32.mrb[0].mxu0
    %334 = vdwg.mxu0
    %v336 = vsel %vm172, %v332, 0
    %338 = vmatprep.subr.mxu0 0.0
    %339 = vmatpush1.msra.mxu0 %v157
    %340 = vmatprep.subr.mxu0 0.0
    %341 = vmatpush1.msra.mxu0 0.0
    %342 = vmatprep.subr.mxu0 0.0
    %343 = vmatpush1.msra.mxu0 0.0
    %344 = vmatprep.subr.mxu0 0.0
    %345 = vmatpush1.msra.mxu0 0.0
    %346 = vmatprep.subr.mxu0 0.0
    %347 = vmatpush1.msra.mxu0 0.0
    %348 = vmatprep.subr.mxu0 0.0
    %349 = vmatpush1.msra.mxu0 0.0
    %350 = vmatprep.subr.mxu0 0.0
    %351 = vmatpush1.msra.mxu0 0.0
    %352 = vmatprep.subr.mxu0 0.0
    %353 = vmatpush1.msra.mxu0 0.0
    %354 = vmatprep.subr.mxu0 0.0
    %355 = vmatpush1.msra.mxu0 0.0
    %356 = vmatprep.subr.mxu0 0.0
    %357 = vmatpush1.msra.mxu0 0.0
    %358 = vmatprep.subr.mxu0 0.0
    %359 = vmatpush1.msra.mxu0 0.0
    %360 = vmatprep.subr.mxu0 0.0
    %361 = vmatpush1.msra.mxu0 0.0
    %362 = vmatprep.subr.mxu0 0.0
    %363 = vmatpush1.msra.mxu0 0.0
    %364 = vmatprep.subr.mxu0 0.0
    %365 = vmatpush1.msra.mxu0 0.0
    %366 = vmatprep.subr.mxu0 0.0
    %367 = vmatpush1.msra.mxu0 0.0
    %368 = vmatprep.subr.mxu0 0.0
    %369 = vmatpush1.msra.mxu0 0.0
    %370 = vmatprep.subr.mxu0 0.0
    %371 = vmatpush1.msra.mxu0 0.0
    %372 = vmatprep.subr.mxu0 0.0
    %373 = vmatpush1.msra.mxu0 0.0
    %374 = vmatprep.subr.mxu0 0.0
    %375 = vmatpush1.msra.mxu0 0.0
    %376 = vmatprep.subr.mxu0 0.0
    %377 = vmatpush1.msra.mxu0 0.0
    %378 = vmatprep.subr.mxu0 0.0
    %379 = vmatpush1.msra.mxu0 0.0
    %380 = vmatprep.subr.mxu0 0.0
    %381 = vmatpush1.msra.mxu0 0.0
    %382 = vmatprep.subr.mxu0 0.0
    %383 = vmatpush1.msra.mxu0 0.0
    %384 = vmatprep.subr.mxu0 0.0
    %385 = vmatpush1.msra.mxu0 0.0
    %386 = vmatprep.subr.mxu0 0.0
    %387 = vmatpush1.msra.mxu0 0.0
    %388 = vmatprep.subr.mxu0 0.0
    %389 = vmatpush1.msra.mxu0 0.0
    %390 = vmatprep.subr.mxu0 0.0
    %391 = vmatpush1.msra.mxu0 0.0
    %392 = vmatprep.subr.mxu0 0.0
    %393 = vmatpush1.msra.mxu0 0.0
    %394 = vmatprep.subr.mxu0 0.0
    %395 = vmatpush1.msra.mxu0 0.0
    %396 = vmatprep.subr.mxu0 0.0
    %397 = vmatpush1.msra.mxu0 0.0
    %398 = vmatprep.subr.mxu0 0.0
    %399 = vmatpush1.msra.mxu0 0.0
    %400 = vmatprep.subr.mxu0 0.0
    %401 = vmatpush1.msra.mxu0 0.0
    %402 = vmatprep.mubr.f32.mxu0 0.0
    %403 = vmatmul.mubr.f32.gmra.mrb[0].mxu0 %v336
    %v404 = vpop.f32.mrb[0].mxu0
    %v405 = vadd.f32 0.0, %v404
    %v406 = vpop.f32.mrb[0].mxu0
    %407 = vdwg.mxu0
    %v408 = vadd.f32 %v168, %v405
    %409 = vrot.lane.b32.xlu0 %v149, 120
    %v410 = vpop.permute.xlu0 %409
    %411 = vrot.lane.b32.xlu0 %v149, 88
    %v412 = vpop.permute.xlu0 %411
    %v413 = vsel %vm172, %v410, 0
    %v415 = vsel %vm172, %v412, 0
    %417 = vmatprep.subr.mxu0 0.0
    %418 = vmatpush1.xpose.msra.mxu0 %v415
    %419 = vmatprep.subr.mxu0 0.0
    %420 = vmatpush1.xpose.msra.mxu0 0.0
    %421 = vmatprep.subr.mxu0 0.0
    %422 = vmatpush1.xpose.msra.mxu0 0.0
    %423 = vmatprep.subr.mxu0 0.0
    %424 = vmatpush1.xpose.msra.mxu0 0.0
    %425 = vmatprep.subr.mxu0 0.0
    %426 = vmatpush1.xpose.msra.mxu0 0.0
    %427 = vmatprep.subr.mxu0 0.0
    %428 = vmatpush1.xpose.msra.mxu0 0.0
    %429 = vmatprep.subr.mxu0 0.0
    %430 = vmatpush1.xpose.msra.mxu0 0.0
    %431 = vmatprep.subr.mxu0 0.0
    %432 = vmatpush1.xpose.msra.mxu0 0.0
    %433 = vmatprep.subr.mxu0 0.0
    %434 = vmatpush1.xpose.msra.mxu0 0.0
    %435 = vmatprep.subr.mxu0 0.0
    %436 = vmatpush1.xpose.msra.mxu0 0.0
    %437 = vmatprep.subr.mxu0 0.0
    %438 = vmatpush1.xpose.msra.mxu0 0.0
    %439 = vmatprep.subr.mxu0 0.0
    %440 = vmatpush1.xpose.msra.mxu0 0.0
    %441 = vmatprep.subr.mxu0 0.0
    %442 = vmatpush1.xpose.msra.mxu0 0.0
    %443 = vmatprep.subr.mxu0 0.0
    %444 = vmatpush1.xpose.msra.mxu0 0.0
    %445 = vmatprep.subr.mxu0 0.0
    %446 = vmatpush1.xpose.msra.mxu0 0.0
    %447 = vmatprep.subr.mxu0 0.0
    %448 = vmatpush1.xpose.msra.mxu0 0.0
    %449 = vmatprep.subr.mxu0 0.0
    %450 = vmatpush1.xpose.msra.mxu0 0.0
    %451 = vmatprep.subr.mxu0 0.0
    %452 = vmatpush1.xpose.msra.mxu0 0.0
    %453 = vmatprep.subr.mxu0 0.0
    %454 = vmatpush1.xpose.msra.mxu0 0.0
    %455 = vmatprep.subr.mxu0 0.0
    %456 = vmatpush1.xpose.msra.mxu0 0.0
    %457 = vmatprep.subr.mxu0 0.0
    %458 = vmatpush1.xpose.msra.mxu0 0.0
    %459 = vmatprep.subr.mxu0 0.0
    %460 = vmatpush1.xpose.msra.mxu0 0.0
    %461 = vmatprep.subr.mxu0 0.0
    %462 = vmatpush1.xpose.msra.mxu0 0.0
    %463 = vmatprep.subr.mxu0 0.0
    %464 = vmatpush1.xpose.msra.mxu0 0.0
    %465 = vmatprep.subr.mxu0 0.0
    %466 = vmatpush1.xpose.msra.mxu0 0.0
    %467 = vmatprep.subr.mxu0 0.0
    %468 = vmatpush1.xpose.msra.mxu0 0.0
    %469 = vmatprep.subr.mxu0 0.0
    %470 = vmatpush1.xpose.msra.mxu0 0.0
    %471 = vmatprep.subr.mxu0 0.0
    %472 = vmatpush1.xpose.msra.mxu0 0.0
    %473 = vmatprep.subr.mxu0 0.0
    %474 = vmatpush1.xpose.msra.mxu0 0.0
    %475 = vmatprep.subr.mxu0 0.0
    %476 = vmatpush1.xpose.msra.mxu0 0.0
    %477 = vmatprep.subr.mxu0 0.0
    %478 = vmatpush1.xpose.msra.mxu0 0.0
    %479 = vmatprep.subr.mxu0 0.0
    %480 = vmatpush1.xpose.msra.mxu0 0.0
    %481 = vmatprep.mubr.f32.mxu0 0.0
    %482 = vmatmul.mubr.f32.gmra.mrb[0].mxu0 %v413
    %v483 = vpop.f32.mrb[0].mxu0
    %v484 = vadd.f32 0.0, %v483
    %v485 = vpop.f32.mrb[0].mxu0
    %486 = vdwg.mxu0
    %v487 = vmul.f32 %v484, 0.35355338
    %v488 = vsel %vm172, %v487, -inf
    %489 = vmax.xlane.f32.xlu0 %v488
    %v490 = vpop.xlane.xlu0 %489
    %v491 = vsub.f32 %v487, %v490
    %v492 = vmul.f32 %v491, 1.442695
    %v493 = vpow.pop %v492
    %v494 = vsel %vm172, %v493, 0.0
    %495 = vadd.xlane.f32.xlu0 %v494
    %v496 = vpop.xlane.xlu0 %495
    %v497 = vrcp.pop %v496
    %v498 = vmul.f32 %v493, %v497
    %499 = vrot.lane.b32.xlu0 %v149, 56
    %v500 = vpop.permute.xlu0 %499
    %v503 = vsel %vm172, %v498, 0
    %505 = vmatprep.subr.mxu0 0.0
    %506 = vmatpush1.msra.mxu0 %v500
    %507 = vmatprep.subr.mxu0 0.0
    %508 = vmatpush1.msra.mxu0 0.0
    %509 = vmatprep.subr.mxu0 0.0
    %510 = vmatpush1.msra.mxu0 0.0
    %511 = vmatprep.subr.mxu0 0.0
    %512 = vmatpush1.msra.mxu0 0.0
    %513 = vmatprep.subr.mxu0 0.0
    %514 = vmatpush1.msra.mxu0 0.0
    %515 = vmatprep.subr.mxu0 0.0
    %516 = vmatpush1.msra.mxu0 0.0
    %517 = vmatprep.subr.mxu0 0.0
    %518 = vmatpush1.msra.mxu0 0.0
    %519 = vmatprep.subr.mxu0 0.0
    %520 = vmatpush1.msra.mxu0 0.0
    %521 = vmatprep.subr.mxu0 0.0
    %522 = vmatpush1.msra.mxu0 0.0
    %523 = vmatprep.subr.mxu0 0.0
    %524 = vmatpush1.msra.mxu0 0.0
    %525 = vmatprep.subr.mxu0 0.0
    %526 = vmatpush1.msra.mxu0 0.0
    %527 = vmatprep.subr.mxu0 0.0
    %528 = vmatpush1.msra.mxu0 0.0
    %529 = vmatprep.subr.mxu0 0.0
    %530 = vmatpush1.msra.mxu0 0.0
    %531 = vmatprep.subr.mxu0 0.0
    %532 = vmatpush1.msra.mxu0 0.0
    %533 = vmatprep.subr.mxu0 0.0
    %534 = vmatpush1.msra.mxu0 0.0
    %535 = vmatprep.subr.mxu0 0.0
    %536 = vmatpush1.msra.mxu0 0.0
    %537 = vmatprep.subr.mxu0 0.0
    %538 = vmatpush1.msra.mxu0 0.0
    %539 = vmatprep.subr.mxu0 0.0
    %540 = vmatpush1.msra.mxu0 0.0
    %541 = vmatprep.subr.mxu0 0.0
    %542 = vmatpush1.msra.mxu0 0.0
    %543 = vmatprep.subr.mxu0 0.0
    %544 = vmatpush1.msra.mxu0 0.0
    %545 = vmatprep.subr.mxu0 0.0
    %546 = vmatpush1.msra.mxu0 0.0
    %547 = vmatprep.subr.mxu0 0.0
    %548 = vmatpush1.msra.mxu0 0.0
    %549 = vmatprep.subr.mxu0 0.0
    %550 = vmatpush1.msra.mxu0 0.0
    %551 = vmatprep.subr.mxu0 0.0
    %552 = vmatpush1.msra.mxu0 0.0
    %553 = vmatprep.subr.mxu0 0.0
    %554 = vmatpush1.msra.mxu0 0.0
    %555 = vmatprep.subr.mxu0 0.0
    %556 = vmatpush1.msra.mxu0 0.0
    %557 = vmatprep.subr.mxu0 0.0
    %558 = vmatpush1.msra.mxu0 0.0
    %559 = vmatprep.subr.mxu0 0.0
    %560 = vmatpush1.msra.mxu0 0.0
    %561 = vmatprep.subr.mxu0 0.0
    %562 = vmatpush1.msra.mxu0 0.0
    %563 = vmatprep.subr.mxu0 0.0
    %564 = vmatpush1.msra.mxu0 0.0
    %565 = vmatprep.subr.mxu0 0.0
    %566 = vmatpush1.msra.mxu0 0.0
    %567 = vmatprep.subr.mxu0 0.0
    %568 = vmatpush1.msra.mxu0 0.0
    %569 = vmatprep.mubr.f32.mxu0 0.0
    %570 = vmatmul.mubr.f32.gmra.mrb[0].mxu0 %v503
    %v571 = vpop.f32.mrb[0].mxu0
    %v572 = vadd.f32 0.0, %v571
    %v573 = vpop.f32.mrb[0].mxu0
    %574 = vdwg.mxu0
    %v576 = vsel %vm172, %v572, 0
    %578 = vmatprep.subr.mxu0 0.0
    %579 = vmatpush1.msra.mxu0 %v158
    %580 = vmatprep.subr.mxu0 0.0
    %581 = vmatpush1.msra.mxu0 0.0
    %582 = vmatprep.subr.mxu0 0.0
    %583 = vmatpush1.msra.mxu0 0.0
    %584 = vmatprep.subr.mxu0 0.0
    %585 = vmatpush1.msra.mxu0 0.0
    %586 = vmatprep.subr.mxu0 0.0
    %587 = vmatpush1.msra.mxu0 0.0
    %588 = vmatprep.subr.mxu0 0.0
    %589 = vmatpush1.msra.mxu0 0.0
    %590 = vmatprep.subr.mxu0 0.0
    %591 = vmatpush1.msra.mxu0 0.0
    %592 = vmatprep.subr.mxu0 0.0
    %593 = vmatpush1.msra.mxu0 0.0
    %594 = vmatprep.subr.mxu0 0.0
    %595 = vmatpush1.msra.mxu0 0.0
    %596 = vmatprep.subr.mxu0 0.0
    %597 = vmatpush1.msra.mxu0 0.0
    %598 = vmatprep.subr.mxu0 0.0
    %599 = vmatpush1.msra.mxu0 0.0
    %600 = vmatprep.subr.mxu0 0.0
    %601 = vmatpush1.msra.mxu0 0.0
    %602 = vmatprep.subr.mxu0 0.0
    %603 = vmatpush1.msra.mxu0 0.0
    %604 = vmatprep.subr.mxu0 0.0
    %605 = vmatpush1.msra.mxu0 0.0
    %606 = vmatprep.subr.mxu0 0.0
    %607 = vmatpush1.msra.mxu0 0.0
    %608 = vmatprep.subr.mxu0 0.0
    %609 = vmatpush1.msra.mxu0 0.0
    %610 = vmatprep.subr.mxu0 0.0
    %611 = vmatpush1.msra.mxu0 0.0
    %612 = vmatprep.subr.mxu0 0.0
    %613 = vmatpush1.msra.mxu0 0.0
    %614 = vmatprep.subr.mxu0 0.0
    %615 = vmatpush1.msra.mxu0 0.0
    %616 = vmatprep.subr.mxu0 0.0
    %617 = vmatpush1.msra.mxu0 0.0
    %618 = vmatprep.subr.mxu0 0.0
    %619 = vmatpush1.msra.mxu0 0.0
    %620 = vmatprep.subr.mxu0 0.0
    %621 = vmatpush1.msra.mxu0 0.0
    %622 = vmatprep.subr.mxu0 0.0
    %623 = vmatpush1.msra.mxu0 0.0
    %624 = vmatprep.subr.mxu0 0.0
    %625 = vmatpush1.msra.mxu0 0.0
    %626 = vmatprep.subr.mxu0 0.0
    %627 = vmatpush1.msra.mxu0 0.0
    %628 = vmatprep.subr.mxu0 0.0
    %629 = vmatpush1.msra.mxu0 0.0
    %630 = vmatprep.subr.mxu0 0.0
    %631 = vmatpush1.msra.mxu0 0.0
    %632 = vmatprep.subr.mxu0 0.0
    %633 = vmatpush1.msra.mxu0 0.0
    %634 = vmatprep.subr.mxu0 0.0
    %635 = vmatpush1.msra.mxu0 0.0
    %636 = vmatprep.subr.mxu0 0.0
    %637 = vmatpush1.msra.mxu0 0.0
    %638 = vmatprep.subr.mxu0 0.0
    %639 = vmatpush1.msra.mxu0 0.0
    %640 = vmatprep.subr.mxu0 0.0
    %641 = vmatpush1.msra.mxu0 0.0
    %642 = vmatprep.mubr.f32.mxu0 0.0
    %643 = vmatmul.mubr.f32.gmra.mrb[0].mxu0 %v576
    %v644 = vpop.f32.mrb[0].mxu0
    %v645 = vadd.f32 0.0, %v644
    %v646 = vpop.f32.mrb[0].mxu0
    %647 = vdwg.mxu0
    %v648 = vadd.f32 %v408, %v645
    %649 = vrot.lane.b32.xlu0 %v149, 112
    %v650 = vpop.permute.xlu0 %649
    %651 = vrot.lane.b32.xlu0 %v149, 80
    %v652 = vpop.permute.xlu0 %651
    %v653 = vsel %vm172, %v650, 0
    %v655 = vsel %vm172, %v652, 0
    %657 = vmatprep.subr.mxu0 0.0
    %658 = vmatpush1.xpose.msra.mxu0 %v655
    %659 = vmatprep.subr.mxu0 0.0
    %660 = vmatpush1.xpose.msra.mxu0 0.0
    %661 = vmatprep.subr.mxu0 0.0
    %662 = vmatpush1.xpose.msra.mxu0 0.0
    %663 = vmatprep.subr.mxu0 0.0
    %664 = vmatpush1.xpose.msra.mxu0 0.0
    %665 = vmatprep.subr.mxu0 0.0
    %666 = vmatpush1.xpose.msra.mxu0 0.0
    %667 = vmatprep.subr.mxu0 0.0
    %668 = vmatpush1.xpose.msra.mxu0 0.0
    %669 = vmatprep.subr.mxu0 0.0
    %670 = vmatpush1.xpose.msra.mxu0 0.0
    %671 = vmatprep.subr.mxu0 0.0
    %672 = vmatpush1.xpose.msra.mxu0 0.0
    %673 = vmatprep.subr.mxu0 0.0
    %674 = vmatpush1.xpose.msra.mxu0 0.0
    %675 = vmatprep.subr.mxu0 0.0
    %676 = vmatpush1.xpose.msra.mxu0 0.0
    %677 = vmatprep.subr.mxu0 0.0
    %678 = vmatpush1.xpose.msra.mxu0 0.0
    %679 = vmatprep.subr.mxu0 0.0
    %680 = vmatpush1.xpose.msra.mxu0 0.0
    %681 = vmatprep.subr.mxu0 0.0
    %682 = vmatpush1.xpose.msra.mxu0 0.0
    %683 = vmatprep.subr.mxu0 0.0
    %684 = vmatpush1.xpose.msra.mxu0 0.0
    %685 = vmatprep.subr.mxu0 0.0
    %686 = vmatpush1.xpose.msra.mxu0 0.0
    %687 = vmatprep.subr.mxu0 0.0
    %688 = vmatpush1.xpose.msra.mxu0 0.0
    %689 = vmatprep.subr.mxu0 0.0
    %690 = vmatpush1.xpose.msra.mxu0 0.0
    %691 = vmatprep.subr.mxu0 0.0
    %692 = vmatpush1.xpose.msra.mxu0 0.0
    %693 = vmatprep.subr.mxu0 0.0
    %694 = vmatpush1.xpose.msra.mxu0 0.0
    %695 = vmatprep.subr.mxu0 0.0
    %696 = vmatpush1.xpose.msra.mxu0 0.0
    %697 = vmatprep.subr.mxu0 0.0
    %698 = vmatpush1.xpose.msra.mxu0 0.0
    %699 = vmatprep.subr.mxu0 0.0
    %700 = vmatpush1.xpose.msra.mxu0 0.0
    %701 = vmatprep.subr.mxu0 0.0
    %702 = vmatpush1.xpose.msra.mxu0 0.0
    %703 = vmatprep.subr.mxu0 0.0
    %704 = vmatpush1.xpose.msra.mxu0 0.0
    %705 = vmatprep.subr.mxu0 0.0
    %706 = vmatpush1.xpose.msra.mxu0 0.0
    %707 = vmatprep.subr.mxu0 0.0
    %708 = vmatpush1.xpose.msra.mxu0 0.0
    %709 = vmatprep.subr.mxu0 0.0
    %710 = vmatpush1.xpose.msra.mxu0 0.0
    %711 = vmatprep.subr.mxu0 0.0
    %712 = vmatpush1.xpose.msra.mxu0 0.0
    %713 = vmatprep.subr.mxu0 0.0
    %714 = vmatpush1.xpose.msra.mxu0 0.0
    %715 = vmatprep.subr.mxu0 0.0
    %716 = vmatpush1.xpose.msra.mxu0 0.0
    %717 = vmatprep.subr.mxu0 0.0
    %718 = vmatpush1.xpose.msra.mxu0 0.0
    %719 = vmatprep.subr.mxu0 0.0
    %720 = vmatpush1.xpose.msra.mxu0 0.0
    %721 = vmatprep.mubr.f32.mxu0 0.0
    %722 = vmatmul.mubr.f32.gmra.mrb[0].mxu0 %v653
    %v723 = vpop.f32.mrb[0].mxu0
    %v724 = vadd.f32 0.0, %v723
    %v725 = vpop.f32.mrb[0].mxu0
    %726 = vdwg.mxu0
    %v727 = vmul.f32 %v724, 0.35355338
    %v728 = vsel %vm172, %v727, -inf
    %729 = vmax.xlane.f32.xlu0 %v728
    %v730 = vpop.xlane.xlu0 %729
    %v731 = vsub.f32 %v727, %v730
    %v732 = vmul.f32 %v731, 1.442695
    %v733 = vpow.pop %v732
    %v734 = vsel %vm172, %v733, 0.0
    %735 = vadd.xlane.f32.xlu0 %v734
    %v736 = vpop.xlane.xlu0 %735
    %v737 = vrcp.pop %v736
    %v738 = vmul.f32 %v733, %v737
    %739 = vrot.lane.b32.xlu0 %v149, 48
    %v740 = vpop.permute.xlu0 %739
    %v743 = vsel %vm172, %v738, 0
    %745 = vmatprep.subr.mxu0 0.0
    %746 = vmatpush1.msra.mxu0 %v740
    %747 = vmatprep.subr.mxu0 0.0
    %748 = vmatpush1.msra.mxu0 0.0
    %749 = vmatprep.subr.mxu0 0.0
    %750 = vmatpush1.msra.mxu0 0.0
    %751 = vmatprep.subr.mxu0 0.0
    %752 = vmatpush1.msra.mxu0 0.0
    %753 = vmatprep.subr.mxu0 0.0
    %754 = vmatpush1.msra.mxu0 0.0
    %755 = vmatprep.subr.mxu0 0.0
    %756 = vmatpush1.msra.mxu0 0.0
    %757 = vmatprep.subr.mxu0 0.0
    %758 = vmatpush1.msra.mxu0 0.0
    %759 = vmatprep.subr.mxu0 0.0
    %760 = vmatpush1.msra.mxu0 0.0
    %761 = vmatprep.subr.mxu0 0.0
    %762 = vmatpush1.msra.mxu0 0.0
    %763 = vmatprep.subr.mxu0 0.0
    %764 = vmatpush1.msra.mxu0 0.0
    %765 = vmatprep.subr.mxu0 0.0
    %766 = vmatpush1.msra.mxu0 0.0
    %767 = vmatprep.subr.mxu0 0.0
    %768 = vmatpush1.msra.mxu0 0.0
    %769 = vmatprep.subr.mxu0 0.0
    %770 = vmatpush1.msra.mxu0 0.0
    %771 = vmatprep.subr.mxu0 0.0
    %772 = vmatpush1.msra.mxu0 0.0
    %773 = vmatprep.subr.mxu0 0.0
    %774 = vmatpush1.msra.mxu0 0.0
    %775 = vmatprep.subr.mxu0 0.0
    %776 = vmatpush1.msra.mxu0 0.0
    %777 = vmatprep.subr.mxu0 0.0
    %778 = vmatpush1.msra.mxu0 0.0
    %779 = vmatprep.subr.mxu0 0.0
    %780 = vmatpush1.msra.mxu0 0.0
    %781 = vmatprep.subr.mxu0 0.0
    %782 = vmatpush1.msra.mxu0 0.0
    %783 = vmatprep.subr.mxu0 0.0
    %784 = vmatpush1.msra.mxu0 0.0
    %785 = vmatprep.subr.mxu0 0.0
    %786 = vmatpush1.msra.mxu0 0.0
    %787 = vmatprep.subr.mxu0 0.0
    %788 = vmatpush1.msra.mxu0 0.0
    %789 = vmatprep.subr.mxu0 0.0
    %790 = vmatpush1.msra.mxu0 0.0
    %791 = vmatprep.subr.mxu0 0.0
    %792 = vmatpush1.msra.mxu0 0.0
    %793 = vmatprep.subr.mxu0 0.0
    %794 = vmatpush1.msra.mxu0 0.0
    %795 = vmatprep.subr.mxu0 0.0
    %796 = vmatpush1.msra.mxu0 0.0
    %797 = vmatprep.subr.mxu0 0.0
    %798 = vmatpush1.msra.mxu0 0.0
    %799 = vmatprep.subr.mxu0 0.0
    %800 = vmatpush1.msra.mxu0 0.0
    %801 = vmatprep.subr.mxu0 0.0
    %802 = vmatpush1.msra.mxu0 0.0
    %803 = vmatprep.subr.mxu0 0.0
    %804 = vmatpush1.msra.mxu0 0.0
    %805 = vmatprep.subr.mxu0 0.0
    %806 = vmatpush1.msra.mxu0 0.0
    %807 = vmatprep.subr.mxu0 0.0
    %808 = vmatpush1.msra.mxu0 0.0
    %809 = vmatprep.mubr.f32.mxu0 0.0
    %810 = vmatmul.mubr.f32.gmra.mrb[0].mxu0 %v743
    %v811 = vpop.f32.mrb[0].mxu0
    %v812 = vadd.f32 0.0, %v811
    %v813 = vpop.f32.mrb[0].mxu0
    %814 = vdwg.mxu0
    %v816 = vsel %vm172, %v812, 0
    %818 = vmatprep.subr.mxu0 0.0
    %819 = vmatpush1.msra.mxu0 %v159
    %820 = vmatprep.subr.mxu0 0.0
    %821 = vmatpush1.msra.mxu0 0.0
    %822 = vmatprep.subr.mxu0 0.0
    %823 = vmatpush1.msra.mxu0 0.0
    %824 = vmatprep.subr.mxu0 0.0
    %825 = vmatpush1.msra.mxu0 0.0
    %826 = vmatprep.subr.mxu0 0.0
    %827 = vmatpush1.msra.mxu0 0.0
    %828 = vmatprep.subr.mxu0 0.0
    %829 = vmatpush1.msra.mxu0 0.0
    %830 = vmatprep.subr.mxu0 0.0
    %831 = vmatpush1.msra.mxu0 0.0
    %832 = vmatprep.subr.mxu0 0.0
    %833 = vmatpush1.msra.mxu0 0.0
    %834 = vmatprep.subr.mxu0 0.0
    %835 = vmatpush1.msra.mxu0 0.0
    %836 = vmatprep.subr.mxu0 0.0
    %837 = vmatpush1.msra.mxu0 0.0
    %838 = vmatprep.subr.mxu0 0.0
    %839 = vmatpush1.msra.mxu0 0.0
    %840 = vmatprep.subr.mxu0 0.0
    %841 = vmatpush1.msra.mxu0 0.0
    %842 = vmatprep.subr.mxu0 0.0
    %843 = vmatpush1.msra.mxu0 0.0
    %844 = vmatprep.subr.mxu0 0.0
    %845 = vmatpush1.msra.mxu0 0.0
    %846 = vmatprep.subr.mxu0 0.0
    %847 = vmatpush1.msra.mxu0 0.0
    %848 = vmatprep.subr.mxu0 0.0
    %849 = vmatpush1.msra.mxu0 0.0
    %850 = vmatprep.subr.mxu0 0.0
    %851 = vmatpush1.msra.mxu0 0.0
    %852 = vmatprep.subr.mxu0 0.0
    %853 = vmatpush1.msra.mxu0 0.0
    %854 = vmatprep.subr.mxu0 0.0
    %855 = vmatpush1.msra.mxu0 0.0
    %856 = vmatprep.subr.mxu0 0.0
    %857 = vmatpush1.msra.mxu0 0.0
    %858 = vmatprep.subr.mxu0 0.0
    %859 = vmatpush1.msra.mxu0 0.0
    %860 = vmatprep.subr.mxu0 0.0
    %861 = vmatpush1.msra.mxu0 0.0
    %862 = vmatprep.subr.mxu0 0.0
    %863 = vmatpush1.msra.mxu0 0.0
    %864 = vmatprep.subr.mxu0 0.0
    %865 = vmatpush1.msra.mxu0 0.0
    %866 = vmatprep.subr.mxu0 0.0
    %867 = vmatpush1.msra.mxu0 0.0
    %868 = vmatprep.subr.mxu0 0.0
    %869 = vmatpush1.msra.mxu0 0.0
    %870 = vmatprep.subr.mxu0 0.0
    %871 = vmatpush1.msra.mxu0 0.0
    %872 = vmatprep.subr.mxu0 0.0
    %873 = vmatpush1.msra.mxu0 0.0
    %874 = vmatprep.subr.mxu0 0.0
    %875 = vmatpush1.msra.mxu0 0.0
    %876 = vmatprep.subr.mxu0 0.0
    %877 = vmatpush1.msra.mxu0 0.0
    %878 = vmatprep.subr.mxu0 0.0
    %879 = vmatpush1.msra.mxu0 0.0
    %880 = vmatprep.subr.mxu0 0.0
    %881 = vmatpush1.msra.mxu0 0.0
    %882 = vmatprep.mubr.f32.mxu0 0.0
    %883 = vmatmul.mubr.f32.gmra.mrb[0].mxu0 %v816
    %v884 = vpop.f32.mrb[0].mxu0
    %v885 = vadd.f32 0.0, %v884
    %v886 = vpop.f32.mrb[0].mxu0
    %887 = vdwg.mxu0
    %v888 = vadd.f32 %v648, %v885
    %889 = vrot.lane.b32.xlu0 %v149, 104
    %v890 = vpop.permute.xlu0 %889
    %891 = vrot.lane.b32.xlu0 %v149, 72
    %v892 = vpop.permute.xlu0 %891
    %v893 = vsel %vm172, %v890, 0
    %v895 = vsel %vm172, %v892, 0
    %897 = vmatprep.subr.mxu0 0.0
    %898 = vmatpush1.xpose.msra.mxu0 %v895
    %899 = vmatprep.subr.mxu0 0.0
    %900 = vmatpush1.xpose.msra.mxu0 0.0
    %901 = vmatprep.subr.mxu0 0.0
    %902 = vmatpush1.xpose.msra.mxu0 0.0
    %903 = vmatprep.subr.mxu0 0.0
    %904 = vmatpush1.xpose.msra.mxu0 0.0
    %905 = vmatprep.subr.mxu0 0.0
    %906 = vmatpush1.xpose.msra.mxu0 0.0
    %907 = vmatprep.subr.mxu0 0.0
    %908 = vmatpush1.xpose.msra.mxu0 0.0
    %909 = vmatprep.subr.mxu0 0.0
    %910 = vmatpush1.xpose.msra.mxu0 0.0
    %911 = vmatprep.subr.mxu0 0.0
    %912 = vmatpush1.xpose.msra.mxu0 0.0
    %913 = vmatprep.subr.mxu0 0.0
    %914 = vmatpush1.xpose.msra.mxu0 0.0
    %915 = vmatprep.subr.mxu0 0.0
    %916 = vmatpush1.xpose.msra.mxu0 0.0
    %917 = vmatprep.subr.mxu0 0.0
    %918 = vmatpush1.xpose.msra.mxu0 0.0
    %919 = vmatprep.subr.mxu0 0.0
    %920 = vmatpush1.xpose.msra.mxu0 0.0
    %921 = vmatprep.subr.mxu0 0.0
    %922 = vmatpush1.xpose.msra.mxu0 0.0
    %923 = vmatprep.subr.mxu0 0.0
    %924 = vmatpush1.xpose.msra.mxu0 0.0
    %925 = vmatprep.subr.mxu0 0.0
    %926 = vmatpush1.xpose.msra.mxu0 0.0
    %927 = vmatprep.subr.mxu0 0.0
    %928 = vmatpush1.xpose.msra.mxu0 0.0
    %929 = vmatprep.subr.mxu0 0.0
    %930 = vmatpush1.xpose.msra.mxu0 0.0
    %931 = vmatprep.subr.mxu0 0.0
    %932 = vmatpush1.xpose.msra.mxu0 0.0
    %933 = vmatprep.subr.mxu0 0.0
    %934 = vmatpush1.xpose.msra.mxu0 0.0
    %935 = vmatprep.subr.mxu0 0.0
    %936 = vmatpush1.xpose.msra.mxu0 0.0
    %937 = vmatprep.subr.mxu0 0.0
    %938 = vmatpush1.xpose.msra.mxu0 0.0
    %939 = vmatprep.subr.mxu0 0.0
    %940 = vmatpush1.xpose.msra.mxu0 0.0
    %941 = vmatprep.subr.mxu0 0.0
    %942 = vmatpush1.xpose.msra.mxu0 0.0
    %943 = vmatprep.subr.mxu0 0.0
    %944 = vmatpush1.xpose.msra.mxu0 0.0
    %945 = vmatprep.subr.mxu0 0.0
    %946 = vmatpush1.xpose.msra.mxu0 0.0
    %947 = vmatprep.subr.mxu0 0.0
    %948 = vmatpush1.xpose.msra.mxu0 0.0
    %949 = vmatprep.subr.mxu0 0.0
    %950 = vmatpush1.xpose.msra.mxu0 0.0
    %951 = vmatprep.subr.mxu0 0.0
    %952 = vmatpush1.xpose.msra.mxu0 0.0
    %953 = vmatprep.subr.mxu0 0.0
    %954 = vmatpush1.xpose.msra.mxu0 0.0
    %955 = vmatprep.subr.mxu0 0.0
    %956 = vmatpush1.xpose.msra.mxu0 0.0
    %957 = vmatprep.subr.mxu0 0.0
    %958 = vmatpush1.xpose.msra.mxu0 0.0
    %959 = vmatprep.subr.mxu0 0.0
    %960 = vmatpush1.xpose.msra.mxu0 0.0
    %961 = vmatprep.mubr.f32.mxu0 0.0
    %962 = vmatmul.mubr.f32.gmra.mrb[0].mxu0 %v893
    %v963 = vpop.f32.mrb[0].mxu0
    %v964 = vadd.f32 0.0, %v963
    %v965 = vpop.f32.mrb[0].mxu0
    %966 = vdwg.mxu0
    %v967 = vmul.f32 %v964, 0.35355338
    %v968 = vsel %vm172, %v967, -inf
    %969 = vmax.xlane.f32.xlu0 %v968
    %v970 = vpop.xlane.xlu0 %969
    %v971 = vsub.f32 %v967, %v970
    %v972 = vmul.f32 %v971, 1.442695
    %v973 = vpow.pop %v972
    %v974 = vsel %vm172, %v973, 0.0
    %975 = vadd.xlane.f32.xlu0 %v974
    %v976 = vpop.xlane.xlu0 %975
    %v977 = vrcp.pop %v976
    %v978 = vmul.f32 %v973, %v977
    %979 = vrot.lane.b32.xlu0 %v149, 40
    %v980 = vpop.permute.xlu0 %979
    %v983 = vsel %vm172, %v978, 0
    %985 = vmatprep.subr.mxu0 0.0
    %986 = vmatpush1.msra.mxu0 %v980
    %987 = vmatprep.subr.mxu0 0.0
    %988 = vmatpush1.msra.mxu0 0.0
    %989 = vmatprep.subr.mxu0 0.0
    %990 = vmatpush1.msra.mxu0 0.0
    %991 = vmatprep.subr.mxu0 0.0
    %992 = vmatpush1.msra.mxu0 0.0
    %993 = vmatprep.subr.mxu0 0.0
    %994 = vmatpush1.msra.mxu0 0.0
    %995 = vmatprep.subr.mxu0 0.0
    %996 = vmatpush1.msra.mxu0 0.0
    %997 = vmatprep.subr.mxu0 0.0
    %998 = vmatpush1.msra.mxu0 0.0
    %999 = vmatprep.subr.mxu0 0.0
    %1000 = vmatpush1.msra.mxu0 0.0
    %1001 = vmatprep.subr.mxu0 0.0
    %1002 = vmatpush1.msra.mxu0 0.0
    %1003 = vmatprep.subr.mxu0 0.0
    %1004 = vmatpush1.msra.mxu0 0.0
    %1005 = vmatprep.subr.mxu0 0.0
    %1006 = vmatpush1.msra.mxu0 0.0
    %1007 = vmatprep.subr.mxu0 0.0
    %1008 = vmatpush1.msra.mxu0 0.0
    %1009 = vmatprep.subr.mxu0 0.0
    %1010 = vmatpush1.msra.mxu0 0.0
    %1011 = vmatprep.subr.mxu0 0.0
    %1012 = vmatpush1.msra.mxu0 0.0
    %1013 = vmatprep.subr.mxu0 0.0
    %1014 = vmatpush1.msra.mxu0 0.0
    %1015 = vmatprep.subr.mxu0 0.0
    %1016 = vmatpush1.msra.mxu0 0.0
    %1017 = vmatprep.subr.mxu0 0.0
    %1018 = vmatpush1.msra.mxu0 0.0
    %1019 = vmatprep.subr.mxu0 0.0
    %1020 = vmatpush1.msra.mxu0 0.0
    %1021 = vmatprep.subr.mxu0 0.0
    %1022 = vmatpush1.msra.mxu0 0.0
    %1023 = vmatprep.subr.mxu0 0.0
    %1024 = vmatpush1.msra.mxu0 0.0
    %1025 = vmatprep.subr.mxu0 0.0
    %1026 = vmatpush1.msra.mxu0 0.0
    %1027 = vmatprep.subr.mxu0 0.0
    %1028 = vmatpush1.msra.mxu0 0.0
    %1029 = vmatprep.subr.mxu0 0.0
    %1030 = vmatpush1.msra.mxu0 0.0
    %1031 = vmatprep.subr.mxu0 0.0
    %1032 = vmatpush1.msra.mxu0 0.0
    %1033 = vmatprep.subr.mxu0 0.0
    %1034 = vmatpush1.msra.mxu0 0.0
    %1035 = vmatprep.subr.mxu0 0.0
    %1036 = vmatpush1.msra.mxu0 0.0
    %1037 = vmatprep.subr.mxu0 0.0
    %1038 = vmatpush1.msra.mxu0 0.0
    %1039 = vmatprep.subr.mxu0 0.0
    %1040 = vmatpush1.msra.mxu0 0.0
    %1041 = vmatprep.subr.mxu0 0.0
    %1042 = vmatpush1.msra.mxu0 0.0
    %1043 = vmatprep.subr.mxu0 0.0
    %1044 = vmatpush1.msra.mxu0 0.0
    %1045 = vmatprep.subr.mxu0 0.0
    %1046 = vmatpush1.msra.mxu0 0.0
    %1047 = vmatprep.subr.mxu0 0.0
    %1048 = vmatpush1.msra.mxu0 0.0
    %1049 = vmatprep.mubr.f32.mxu0 0.0
    %1050 = vmatmul.mubr.f32.gmra.mrb[0].mxu0 %v983
    %v1051 = vpop.f32.mrb[0].mxu0
    %v1052 = vadd.f32 0.0, %v1051
    %v1053 = vpop.f32.mrb[0].mxu0
    %1054 = vdwg.mxu0
    %v1056 = vsel %vm172, %v1052, 0
    %1058 = vmatprep.subr.mxu0 0.0
    %1059 = vmatpush1.msra.mxu0 %v160
    %1060 = vmatprep.subr.mxu0 0.0
    %1061 = vmatpush1.msra.mxu0 0.0
    %1062 = vmatprep.subr.mxu0 0.0
    %1063 = vmatpush1.msra.mxu0 0.0
    %1064 = vmatprep.subr.mxu0 0.0
    %1065 = vmatpush1.msra.mxu0 0.0
    %1066 = vmatprep.subr.mxu0 0.0
    %1067 = vmatpush1.msra.mxu0 0.0
    %1068 = vmatprep.subr.mxu0 0.0
    %1069 = vmatpush1.msra.mxu0 0.0
    %1070 = vmatprep.subr.mxu0 0.0
    %1071 = vmatpush1.msra.mxu0 0.0
    %1072 = vmatprep.subr.mxu0 0.0
    %1073 = vmatpush1.msra.mxu0 0.0
    %1074 = vmatprep.subr.mxu0 0.0
    %1075 = vmatpush1.msra.mxu0 0.0
    %1076 = vmatprep.subr.mxu0 0.0
    %1077 = vmatpush1.msra.mxu0 0.0
    %1078 = vmatprep.subr.mxu0 0.0
    %1079 = vmatpush1.msra.mxu0 0.0
    %1080 = vmatprep.subr.mxu0 0.0
    %1081 = vmatpush1.msra.mxu0 0.0
    %1082 = vmatprep.subr.mxu0 0.0
    %1083 = vmatpush1.msra.mxu0 0.0
    %1084 = vmatprep.subr.mxu0 0.0
    %1085 = vmatpush1.msra.mxu0 0.0
    %1086 = vmatprep.subr.mxu0 0.0
    %1087 = vmatpush1.msra.mxu0 0.0
    %1088 = vmatprep.subr.mxu0 0.0
    %1089 = vmatpush1.msra.mxu0 0.0
    %1090 = vmatprep.subr.mxu0 0.0
    %1091 = vmatpush1.msra.mxu0 0.0
    %1092 = vmatprep.subr.mxu0 0.0
    %1093 = vmatpush1.msra.mxu0 0.0
    %1094 = vmatprep.subr.mxu0 0.0
    %1095 = vmatpush1.msra.mxu0 0.0
    %1096 = vmatprep.subr.mxu0 0.0
    %1097 = vmatpush1.msra.mxu0 0.0
    %1098 = vmatprep.subr.mxu0 0.0
    %1099 = vmatpush1.msra.mxu0 0.0
    %1100 = vmatprep.subr.mxu0 0.0
    %1101 = vmatpush1.msra.mxu0 0.0
    %1102 = vmatprep.subr.mxu0 0.0
    %1103 = vmatpush1.msra.mxu0 0.0
    %1104 = vmatprep.subr.mxu0 0.0
    %1105 = vmatpush1.msra.mxu0 0.0
    %1106 = vmatprep.subr.mxu0 0.0
    %1107 = vmatpush1.msra.mxu0 0.0
    %1108 = vmatprep.subr.mxu0 0.0
    %1109 = vmatpush1.msra.mxu0 0.0
    %1110 = vmatprep.subr.mxu0 0.0
    %1111 = vmatpush1.msra.mxu0 0.0
    %1112 = vmatprep.subr.mxu0 0.0
    %1113 = vmatpush1.msra.mxu0 0.0
    %1114 = vmatprep.subr.mxu0 0.0
    %1115 = vmatpush1.msra.mxu0 0.0
    %1116 = vmatprep.subr.mxu0 0.0
    %1117 = vmatpush1.msra.mxu0 0.0
    %1118 = vmatprep.subr.mxu0 0.0
    %1119 = vmatpush1.msra.mxu0 0.0
    %1120 = vmatprep.subr.mxu0 0.0
    %1121 = vmatpush1.msra.mxu0 0.0
    %1122 = vmatprep.mubr.f32.mxu0 0.0
    %1123 = vmatmul.mubr.f32.gmra.mrb[0].mxu0 %v1056
    %v1124 = vpop.f32.mrb[0].mxu0
    %v1125 = vadd.f32 0.0, %v1124
    %v1126 = vpop.f32.mrb[0].mxu0
    %1127 = vdwg.mxu0
    %v1128 = vadd.f32 %v888, %v1125
    %1129 = vst.msk [vmem:[#allocation8] sm:$0xff] %vm75, %v1128
    %1131 = vrot.lane.b32.xlu0 %v154, 96
    %v1132 = vpop.permute.xlu0 %1131
    %v1133 = vsel %vm172, %v154, 0
    %v1135 = vsel %vm172, %v1132, 0
    %1137 = vmatprep.subr.mxu0 0.0
    %1138 = vmatpush1.xpose.msra.mxu0 %v1135
    %1139 = vmatprep.subr.mxu0 0.0
    %1140 = vmatpush1.xpose.msra.mxu0 0.0
    %1141 = vmatprep.subr.mxu0 0.0
    %1142 = vmatpush1.xpose.msra.mxu0 0.0
    %1143 = vmatprep.subr.mxu0 0.0
    %1144 = vmatpush1.xpose.msra.mxu0 0.0
    %1145 = vmatprep.subr.mxu0 0.0
    %1146 = vmatpush1.xpose.msra.mxu0 0.0
    %1147 = vmatprep.subr.mxu0 0.0
    %1148 = vmatpush1.xpose.msra.mxu0 0.0
    %1149 = vmatprep.subr.mxu0 0.0
    %1150 = vmatpush1.xpose.msra.mxu0 0.0
    %1151 = vmatprep.subr.mxu0 0.0
    %1152 = vmatpush1.xpose.msra.mxu0 0.0
    %1153 = vmatprep.subr.mxu0 0.0
    %1154 = vmatpush1.xpose.msra.mxu0 0.0
    %1155 = vmatprep.subr.mxu0 0.0
    %1156 = vmatpush1.xpose.msra.mxu0 0.0
    %1157 = vmatprep.subr.mxu0 0.0
    %1158 = vmatpush1.xpose.msra.mxu0 0.0
    %1159 = vmatprep.subr.mxu0 0.0
    %1160 = vmatpush1.xpose.msra.mxu0 0.0
    %1161 = vmatprep.subr.mxu0 0.0
    %1162 = vmatpush1.xpose.msra.mxu0 0.0
    %1163 = vmatprep.subr.mxu0 0.0
    %1164 = vmatpush1.xpose.msra.mxu0 0.0
    %1165 = vmatprep.subr.mxu0 0.0
    %1166 = vmatpush1.xpose.msra.mxu0 0.0
    %1167 = vmatprep.subr.mxu0 0.0
    %1168 = vmatpush1.xpose.msra.mxu0 0.0
    %1169 = vmatprep.subr.mxu0 0.0
    %1170 = vmatpush1.xpose.msra.mxu0 0.0
    %1171 = vmatprep.subr.mxu0 0.0
    %1172 = vmatpush1.xpose.msra.mxu0 0.0
    %1173 = vmatprep.subr.mxu0 0.0
    %1174 = vmatpush1.xpose.msra.mxu0 0.0
    %1175 = vmatprep.subr.mxu0 0.0
    %1176 = vmatpush1.xpose.msra.mxu0 0.0
    %1177 = vmatprep.subr.mxu0 0.0
    %1178 = vmatpush1.xpose.msra.mxu0 0.0
    %1179 = vmatprep.subr.mxu0 0.0
    %1180 = vmatpush1.xpose.msra.mxu0 0.0
    %1181 = vmatprep.subr.mxu0 0.0
    %1182 = vmatpush1.xpose.msra.mxu0 0.0
    %1183 = vmatprep.subr.mxu0 0.0
    %1184 = vmatpush1.xpose.msra.mxu0 0.0
    %1185 = vmatprep.subr.mxu0 0.0
    %1186 = vmatpush1.xpose.msra.mxu0 0.0
    %1187 = vmatprep.subr.mxu0 0.0
    %1188 = vmatpush1.xpose.msra.mxu0 0.0
    %1189 = vmatprep.subr.mxu0 0.0
    %1190 = vmatpush1.xpose.msra.mxu0 0.0
    %1191 = vmatprep.subr.mxu0 0.0
    %1192 = vmatpush1.xpose.msra.mxu0 0.0
    %1193 = vmatprep.subr.mxu0 0.0
    %1194 = vmatpush1.xpose.msra.mxu0 0.0
    %1195 = vmatprep.subr.mxu0 0.0
    %1196 = vmatpush1.xpose.msra.mxu0 0.0
    %1197 = vmatprep.subr.mxu0 0.0
    %1198 = vmatpush1.xpose.msra.mxu0 0.0
    %1199 = vmatprep.subr.mxu0 0.0
    %1200 = vmatpush1.xpose.msra.mxu0 0.0
    %1201 = vmatprep.mubr.f32.mxu0 0.0
    %1202 = vmatmul.mubr.f32.gmra.mrb[0].mxu0 %v1133
    %v1203 = vpop.f32.mrb[0].mxu0
    %v1204 = vadd.f32 0.0, %v1203
    %v1205 = vpop.f32.mrb[0].mxu0
    %1206 = vdwg.mxu0
    %v1207 = vmul.f32 %v1204, 0.35355338
    %v1208 = vsel %vm172, %v1207, -inf
    %1209 = vmax.xlane.f32.xlu0 %v1208
    %v1210 = vpop.xlane.xlu0 %1209
    %v1211 = vsub.f32 %v1207, %v1210
    %v1212 = vmul.f32 %v1211, 1.442695
    %v1213 = vpow.pop %v1212
    %v1214 = vsel %vm172, %v1213, 0.0
    %1215 = vadd.xlane.f32.xlu0 %v1214
    %v1216 = vpop.xlane.xlu0 %1215
    %v1217 = vrcp.pop %v1216
    %v1218 = vmul.f32 %v1213, %v1217
    %1219 = vrot.lane.b32.xlu0 %v154, 64
    %v1220 = vpop.permute.xlu0 %1219
    %v1223 = vsel %vm172, %v1218, 0
    %1225 = vmatprep.subr.mxu0 0.0
    %1226 = vmatpush1.msra.mxu0 %v1220
    %1227 = vmatprep.subr.mxu0 0.0
    %1228 = vmatpush1.msra.mxu0 0.0
    %1229 = vmatprep.subr.mxu0 0.0
    %1230 = vmatpush1.msra.mxu0 0.0
    %1231 = vmatprep.subr.mxu0 0.0
    %1232 = vmatpush1.msra.mxu0 0.0
    %1233 = vmatprep.subr.mxu0 0.0
    %1234 = vmatpush1.msra.mxu0 0.0
    %1235 = vmatprep.subr.mxu0 0.0
    %1236 = vmatpush1.msra.mxu0 0.0
    %1237 = vmatprep.subr.mxu0 0.0
    %1238 = vmatpush1.msra.mxu0 0.0
    %1239 = vmatprep.subr.mxu0 0.0
    %1240 = vmatpush1.msra.mxu0 0.0
    %1241 = vmatprep.subr.mxu0 0.0
    %1242 = vmatpush1.msra.mxu0 0.0
    %1243 = vmatprep.subr.mxu0 0.0
    %1244 = vmatpush1.msra.mxu0 0.0
    %1245 = vmatprep.subr.mxu0 0.0
    %1246 = vmatpush1.msra.mxu0 0.0
    %1247 = vmatprep.subr.mxu0 0.0
    %1248 = vmatpush1.msra.mxu0 0.0
    %1249 = vmatprep.subr.mxu0 0.0
    %1250 = vmatpush1.msra.mxu0 0.0
    %1251 = vmatprep.subr.mxu0 0.0
    %1252 = vmatpush1.msra.mxu0 0.0
    %1253 = vmatprep.subr.mxu0 0.0
    %1254 = vmatpush1.msra.mxu0 0.0
    %1255 = vmatprep.subr.mxu0 0.0
    %1256 = vmatpush1.msra.mxu0 0.0
    %1257 = vmatprep.subr.mxu0 0.0
    %1258 = vmatpush1.msra.mxu0 0.0
    %1259 = vmatprep.subr.mxu0 0.0
    %1260 = vmatpush1.msra.mxu0 0.0
    %1261 = vmatprep.subr.mxu0 0.0
    %1262 = vmatpush1.msra.mxu0 0.0
    %1263 = vmatprep.subr.mxu0 0.0
    %1264 = vmatpush1.msra.mxu0 0.0
    %1265 = vmatprep.subr.mxu0 0.0
    %1266 = vmatpush1.msra.mxu0 0.0
    %1267 = vmatprep.subr.mxu0 0.0
    %1268 = vmatpush1.msra.mxu0 0.0
    %1269 = vmatprep.subr.mxu0 0.0
    %1270 = vmatpush1.msra.mxu0 0.0
    %1271 = vmatprep.subr.mxu0 0.0
    %1272 = vmatpush1.msra.mxu0 0.0
    %1273 = vmatprep.subr.mxu0 0.0
    %1274 = vmatpush1.msra.mxu0 0.0
    %1275 = vmatprep.subr.mxu0 0.0
    %1276 = vmatpush1.msra.mxu0 0.0
    %1277 = vmatprep.subr.mxu0 0.0
    %1278 = vmatpush1.msra.mxu0 0.0
    %1279 = vmatprep.subr.mxu0 0.0
    %1280 = vmatpush1.msra.mxu0 0.0
    %1281 = vmatprep.subr.mxu0 0.0
    %1282 = vmatpush1.msra.mxu0 0.0
    %1283 = vmatprep.subr.mxu0 0.0
    %1284 = vmatpush1.msra.mxu0 0.0
    %1285 = vmatprep.subr.mxu0 0.0
    %1286 = vmatpush1.msra.mxu0 0.0
    %1287 = vmatprep.subr.mxu0 0.0
    %1288 = vmatpush1.msra.mxu0 0.0
    %1289 = vmatprep.mubr.f32.mxu0 0.0
    %1290 = vmatmul.mubr.f32.gmra.mrb[0].mxu0 %v1223
    %v1291 = vpop.f32.mrb[0].mxu0
    %v1292 = vadd.f32 0.0, %v1291
    %v1293 = vpop.f32.mrb[0].mxu0
    %1294 = vdwg.mxu0
    %v1296 = vsel %vm172, %v1292, 0
    %1298 = vmatprep.subr.mxu0 0.0
    %1299 = vmatpush1.msra.mxu0 %v157
    %1300 = vmatprep.subr.mxu0 0.0
    %1301 = vmatpush1.msra.mxu0 0.0
    %1302 = vmatprep.subr.mxu0 0.0
    %1303 = vmatpush1.msra.mxu0 0.0
    %1304 = vmatprep.subr.mxu0 0.0
    %1305 = vmatpush1.msra.mxu0 0.0
    %1306 = vmatprep.subr.mxu0 0.0
    %1307 = vmatpush1.msra.mxu0 0.0
    %1308 = vmatprep.subr.mxu0 0.0
    %1309 = vmatpush1.msra.mxu0 0.0
    %1310 = vmatprep.subr.mxu0 0.0
    %1311 = vmatpush1.msra.mxu0 0.0
    %1312 = vmatprep.subr.mxu0 0.0
    %1313 = vmatpush1.msra.mxu0 0.0
    %1314 = vmatprep.subr.mxu0 0.0
    %1315 = vmatpush1.msra.mxu0 0.0
    %1316 = vmatprep.subr.mxu0 0.0
    %1317 = vmatpush1.msra.mxu0 0.0
    %1318 = vmatprep.subr.mxu0 0.0
    %1319 = vmatpush1.msra.mxu0 0.0
    %1320 = vmatprep.subr.mxu0 0.0
    %1321 = vmatpush1.msra.mxu0 0.0
    %1322 = vmatprep.subr.mxu0 0.0
    %1323 = vmatpush1.msra.mxu0 0.0
    %1324 = vmatprep.subr.mxu0 0.0
    %1325 = vmatpush1.msra.mxu0 0.0
    %1326 = vmatprep.subr.mxu0 0.0
    %1327 = vmatpush1.msra.mxu0 0.0
    %1328 = vmatprep.subr.mxu0 0.0
    %1329 = vmatpush1.msra.mxu0 0.0
    %1330 = vmatprep.subr.mxu0 0.0
    %1331 = vmatpush1.msra.mxu0 0.0
    %1332 = vmatprep.subr.mxu0 0.0
    %1333 = vmatpush1.msra.mxu0 0.0
    %1334 = vmatprep.subr.mxu0 0.0
    %1335 = vmatpush1.msra.mxu0 0.0
    %1336 = vmatprep.subr.mxu0 0.0
    %1337 = vmatpush1.msra.mxu0 0.0
    %1338 = vmatprep.subr.mxu0 0.0
    %1339 = vmatpush1.msra.mxu0 0.0
    %1340 = vmatprep.subr.mxu0 0.0
    %1341 = vmatpush1.msra.mxu0 0.0
    %1342 = vmatprep.subr.mxu0 0.0
    %1343 = vmatpush1.msra.mxu0 0.0
    %1344 = vmatprep.subr.mxu0 0.0
    %1345 = vmatpush1.msra.mxu0 0.0
    %1346 = vmatprep.subr.mxu0 0.0
    %1347 = vmatpush1.msra.mxu0 0.0
    %1348 = vmatprep.subr.mxu0 0.0
    %1349 = vmatpush1.msra.mxu0 0.0
    %1350 = vmatprep.subr.mxu0 0.0
    %1351 = vmatpush1.msra.mxu0 0.0
    %1352 = vmatprep.subr.mxu0 0.0
    %1353 = vmatpush1.msra.mxu0 0.0
    %1354 = vmatprep.subr.mxu0 0.0
    %1355 = vmatpush1.msra.mxu0 0.0
    %1356 = vmatprep.subr.mxu0 0.0
    %1357 = vmatpush1.msra.mxu0 0.0
    %1358 = vmatprep.subr.mxu0 0.0
    %1359 = vmatpush1.msra.mxu0 0.0
    %1360 = vmatprep.subr.mxu0 0.0
    %1361 = vmatpush1.msra.mxu0 0.0
    %1362 = vmatprep.mubr.f32.mxu0 0.0
    %1363 = vmatmul.mubr.f32.gmra.mrb[0].mxu0 %v1296
    %v1364 = vpop.f32.mrb[0].mxu0
    %v1365 = vadd.f32 0.0, %v1364
    %v1366 = vpop.f32.mrb[0].mxu0
    %1367 = vdwg.mxu0
    %v1368 = vadd.f32 %v168, %v1365
    %1369 = vrot.lane.b32.xlu0 %v154, 120
    %v1370 = vpop.permute.xlu0 %1369
    %1371 = vrot.lane.b32.xlu0 %v154, 88
    %v1372 = vpop.permute.xlu0 %1371
    %v1373 = vsel %vm172, %v1370, 0
    %v1375 = vsel %vm172, %v1372, 0
    %1377 = vmatprep.subr.mxu0 0.0
    %1378 = vmatpush1.xpose.msra.mxu0 %v1375
    %1379 = vmatprep.subr.mxu0 0.0
    %1380 = vmatpush1.xpose.msra.mxu0 0.0
    %1381 = vmatprep.subr.mxu0 0.0
    %1382 = vmatpush1.xpose.msra.mxu0 0.0
    %1383 = vmatprep.subr.mxu0 0.0
    %1384 = vmatpush1.xpose.msra.mxu0 0.0
    %1385 = vmatprep.subr.mxu0 0.0
    %1386 = vmatpush1.xpose.msra.mxu0 0.0
    %1387 = vmatprep.subr.mxu0 0.0
    %1388 = vmatpush1.xpose.msra.mxu0 0.0
    %1389 = vmatprep.subr.mxu0 0.0
    %1390 = vmatpush1.xpose.msra.mxu0 0.0
    %1391 = vmatprep.subr.mxu0 0.0
    %1392 = vmatpush1.xpose.msra.mxu0 0.0
    %1393 = vmatprep.subr.mxu0 0.0
    %1394 = vmatpush1.xpose.msra.mxu0 0.0
    %1395 = vmatprep.subr.mxu0 0.0
    %1396 = vmatpush1.xpose.msra.mxu0 0.0
    %1397 = vmatprep.subr.mxu0 0.0
    %1398 = vmatpush1.xpose.msra.mxu0 0.0
    %1399 = vmatprep.subr.mxu0 0.0
    %1400 = vmatpush1.xpose.msra.mxu0 0.0
    %1401 = vmatprep.subr.mxu0 0.0
    %1402 = vmatpush1.xpose.msra.mxu0 0.0
    %1403 = vmatprep.subr.mxu0 0.0
    %1404 = vmatpush1.xpose.msra.mxu0 0.0
    %1405 = vmatprep.subr.mxu0 0.0
    %1406 = vmatpush1.xpose.msra.mxu0 0.0
    %1407 = vmatprep.subr.mxu0 0.0
    %1408 = vmatpush1.xpose.msra.mxu0 0.0
    %1409 = vmatprep.subr.mxu0 0.0
    %1410 = vmatpush1.xpose.msra.mxu0 0.0
    %1411 = vmatprep.subr.mxu0 0.0
    %1412 = vmatpush1.xpose.msra.mxu0 0.0
    %1413 = vmatprep.subr.mxu0 0.0
    %1414 = vmatpush1.xpose.msra.mxu0 0.0
    %1415 = vmatprep.subr.mxu0 0.0
    %1416 = vmatpush1.xpose.msra.mxu0 0.0
    %1417 = vmatprep.subr.mxu0 0.0
    %1418 = vmatpush1.xpose.msra.mxu0 0.0
    %1419 = vmatprep.subr.mxu0 0.0
    %1420 = vmatpush1.xpose.msra.mxu0 0.0
    %1421 = vmatprep.subr.mxu0 0.0
    %1422 = vmatpush1.xpose.msra.mxu0 0.0
    %1423 = vmatprep.subr.mxu0 0.0
    %1424 = vmatpush1.xpose.msra.mxu0 0.0
    %1425 = vmatprep.subr.mxu0 0.0
    %1426 = vmatpush1.xpose.msra.mxu0 0.0
    %1427 = vmatprep.subr.mxu0 0.0
    %1428 = vmatpush1.xpose.msra.mxu0 0.0
    %1429 = vmatprep.subr.mxu0 0.0
    %1430 = vmatpush1.xpose.msra.mxu0 0.0
    %1431 = vmatprep.subr.mxu0 0.0
    %1432 = vmatpush1.xpose.msra.mxu0 0.0
    %1433 = vmatprep.subr.mxu0 0.0
    %1434 = vmatpush1.xpose.msra.mxu0 0.0
    %1435 = vmatprep.subr.mxu0 0.0
    %1436 = vmatpush1.xpose.msra.mxu0 0.0
    %1437 = vmatprep.subr.mxu0 0.0
    %1438 = vmatpush1.xpose.msra.mxu0 0.0
    %1439 = vmatprep.subr.mxu0 0.0
    %1440 = vmatpush1.xpose.msra.mxu0 0.0
    %1441 = vmatprep.mubr.f32.mxu0 0.0
    %1442 = vmatmul.mubr.f32.gmra.mrb[0].mxu0 %v1373
    %v1443 = vpop.f32.mrb[0].mxu0
    %v1444 = vadd.f32 0.0, %v1443
    %v1445 = vpop.f32.mrb[0].mxu0
    %1446 = vdwg.mxu0
    %v1447 = vmul.f32 %v1444, 0.35355338
    %v1448 = vsel %vm172, %v1447, -inf
    %1449 = vmax.xlane.f32.xlu0 %v1448
    %v1450 = vpop.xlane.xlu0 %1449
    %v1451 = vsub.f32 %v1447, %v1450
    %v1452 = vmul.f32 %v1451, 1.442695
    %v1453 = vpow.pop %v1452
    %v1454 = vsel %vm172, %v1453, 0.0
    %1455 = vadd.xlane.f32.xlu0 %v1454
    %v1456 = vpop.xlane.xlu0 %1455
    %v1457 = vrcp.pop %v1456
    %v1458 = vmul.f32 %v1453, %v1457
    %1459 = vrot.lane.b32.xlu0 %v154, 56
    %v1460 = vpop.permute.xlu0 %1459
    %v1463 = vsel %vm172, %v1458, 0
    %1465 = vmatprep.subr.mxu0 0.0
    %1466 = vmatpush1.msra.mxu0 %v1460
    %1467 = vmatprep.subr.mxu0 0.0
    %1468 = vmatpush1.msra.mxu0 0.0
    %1469 = vmatprep.subr.mxu0 0.0
    %1470 = vmatpush1.msra.mxu0 0.0
    %1471 = vmatprep.subr.mxu0 0.0
    %1472 = vmatpush1.msra.mxu0 0.0
    %1473 = vmatprep.subr.mxu0 0.0
    %1474 = vmatpush1.msra.mxu0 0.0
    %1475 = vmatprep.subr.mxu0 0.0
    %1476 = vmatpush1.msra.mxu0 0.0
    %1477 = vmatprep.subr.mxu0 0.0
    %1478 = vmatpush1.msra.mxu0 0.0
    %1479 = vmatprep.subr.mxu0 0.0
    %1480 = vmatpush1.msra.mxu0 0.0
    %1481 = vmatprep.subr.mxu0 0.0
    %1482 = vmatpush1.msra.mxu0 0.0
    %1483 = vmatprep.subr.mxu0 0.0
    %1484 = vmatpush1.msra.mxu0 0.0
    %1485 = vmatprep.subr.mxu0 0.0
    %1486 = vmatpush1.msra.mxu0 0.0
    %1487 = vmatprep.subr.mxu0 0.0
    %1488 = vmatpush1.msra.mxu0 0.0
    %1489 = vmatprep.subr.mxu0 0.0
    %1490 = vmatpush1.msra.mxu0 0.0
    %1491 = vmatprep.subr.mxu0 0.0
    %1492 = vmatpush1.msra.mxu0 0.0
    %1493 = vmatprep.subr.mxu0 0.0
    %1494 = vmatpush1.msra.mxu0 0.0
    %1495 = vmatprep.subr.mxu0 0.0
    %1496 = vmatpush1.msra.mxu0 0.0
    %1497 = vmatprep.subr.mxu0 0.0
    %1498 = vmatpush1.msra.mxu0 0.0
    %1499 = vmatprep.subr.mxu0 0.0
    %1500 = vmatpush1.msra.mxu0 0.0
    %1501 = vmatprep.subr.mxu0 0.0
    %1502 = vmatpush1.msra.mxu0 0.0
    %1503 = vmatprep.subr.mxu0 0.0
    %1504 = vmatpush1.msra.mxu0 0.0
    %1505 = vmatprep.subr.mxu0 0.0
    %1506 = vmatpush1.msra.mxu0 0.0
    %1507 = vmatprep.subr.mxu0 0.0
    %1508 = vmatpush1.msra.mxu0 0.0
    %1509 = vmatprep.subr.mxu0 0.0
    %1510 = vmatpush1.msra.mxu0 0.0
    %1511 = vmatprep.subr.mxu0 0.0
    %1512 = vmatpush1.msra.mxu0 0.0
    %1513 = vmatprep.subr.mxu0 0.0
    %1514 = vmatpush1.msra.mxu0 0.0
    %1515 = vmatprep.subr.mxu0 0.0
    %1516 = vmatpush1.msra.mxu0 0.0
    %1517 = vmatprep.subr.mxu0 0.0
    %1518 = vmatpush1.msra.mxu0 0.0
    %1519 = vmatprep.subr.mxu0 0.0
    %1520 = vmatpush1.msra.mxu0 0.0
    %1521 = vmatprep.subr.mxu0 0.0
    %1522 = vmatpush1.msra.mxu0 0.0
    %1523 = vmatprep.subr.mxu0 0.0
    %1524 = vmatpush1.msra.mxu0 0.0
    %1525 = vmatprep.subr.mxu0 0.0
    %1526 = vmatpush1.msra.mxu0 0.0
    %1527 = vmatprep.subr.mxu0 0.0
    %1528 = vmatpush1.msra.mxu0 0.0
    %1529 = vmatprep.mubr.f32.mxu0 0.0
    %1530 = vmatmul.mubr.f32.gmra.mrb[0].mxu0 %v1463
    %v1531 = vpop.f32.mrb[0].mxu0
    %v1532 = vadd.f32 0.0, %v1531
    %v1533 = vpop.f32.mrb[0].mxu0
    %1534 = vdwg.mxu0
    %v1536 = vsel %vm172, %v1532, 0
    %1538 = vmatprep.subr.mxu0 0.0
    %1539 = vmatpush1.msra.mxu0 %v158
    %1540 = vmatprep.subr.mxu0 0.0
    %1541 = vmatpush1.msra.mxu0 0.0
    %1542 = vmatprep.subr.mxu0 0.0
    %1543 = vmatpush1.msra.mxu0 0.0
    %1544 = vmatprep.subr.mxu0 0.0
    %1545 = vmatpush1.msra.mxu0 0.0
    %1546 = vmatprep.subr.mxu0 0.0
    %1547 = vmatpush1.msra.mxu0 0.0
    %1548 = vmatprep.subr.mxu0 0.0
    %1549 = vmatpush1.msra.mxu0 0.0
    %1550 = vmatprep.subr.mxu0 0.0
    %1551 = vmatpush1.msra.mxu0 0.0
    %1552 = vmatprep.subr.mxu0 0.0
    %1553 = vmatpush1.msra.mxu0 0.0
    %1554 = vmatprep.subr.mxu0 0.0
    %1555 = vmatpush1.msra.mxu0 0.0
    %1556 = vmatprep.subr.mxu0 0.0
    %1557 = vmatpush1.msra.mxu0 0.0
    %1558 = vmatprep.subr.mxu0 0.0
    %1559 = vmatpush1.msra.mxu0 0.0
    %1560 = vmatprep.subr.mxu0 0.0
    %1561 = vmatpush1.msra.mxu0 0.0
    %1562 = vmatprep.subr.mxu0 0.0
    %1563 = vmatpush1.msra.mxu0 0.0
    %1564 = vmatprep.subr.mxu0 0.0
    %1565 = vmatpush1.msra.mxu0 0.0
    %1566 = vmatprep.subr.mxu0 0.0
    %1567 = vmatpush1.msra.mxu0 0.0
    %1568 = vmatprep.subr.mxu0 0.0
    %1569 = vmatpush1.msra.mxu0 0.0
    %1570 = vmatprep.subr.mxu0 0.0
    %1571 = vmatpush1.msra.mxu0 0.0
    %1572 = vmatprep.subr.mxu0 0.0
    %1573 = vmatpush1.msra.mxu0 0.0
    %1574 = vmatprep.subr.mxu0 0.0
    %1575 = vmatpush1.msra.mxu0 0.0
    %1576 = vmatprep.subr.mxu0 0.0
    %1577 = vmatpush1.msra.mxu0 0.0
    %1578 = vmatprep.subr.mxu0 0.0
    %1579 = vmatpush1.msra.mxu0 0.0
    %1580 = vmatprep.subr.mxu0 0.0
    %1581 = vmatpush1.msra.mxu0 0.0
    %1582 = vmatprep.subr.mxu0 0.0
    %1583 = vmatpush1.msra.mxu0 0.0
    %1584 = vmatprep.subr.mxu0 0.0
    %1585 = vmatpush1.msra.mxu0 0.0
    %1586 = vmatprep.subr.mxu0 0.0
    %1587 = vmatpush1.msra.mxu0 0.0
    %1588 = vmatprep.subr.mxu0 0.0
    %1589 = vmatpush1.msra.mxu0 0.0
    %1590 = vmatprep.subr.mxu0 0.0
    %1591 = vmatpush1.msra.mxu0 0.0
    %1592 = vmatprep.subr.mxu0 0.0
    %1593 = vmatpush1.msra.mxu0 0.0
    %1594 = vmatprep.subr.mxu0 0.0
    %1595 = vmatpush1.msra.mxu0 0.0
    %1596 = vmatprep.subr.mxu0 0.0
    %1597 = vmatpush1.msra.mxu0 0.0
    %1598 = vmatprep.subr.mxu0 0.0
    %1599 = vmatpush1.msra.mxu0 0.0
    %1600 = vmatprep.subr.mxu0 0.0
    %1601 = vmatpush1.msra.mxu0 0.0
    %1602 = vmatprep.mubr.f32.mxu0 0.0
    %1603 = vmatmul.mubr.f32.gmra.mrb[0].mxu0 %v1536
    %v1604 = vpop.f32.mrb[0].mxu0
    %v1605 = vadd.f32 0.0, %v1604
    %v1606 = vpop.f32.mrb[0].mxu0
    %1607 = vdwg.mxu0
    %v1608 = vadd.f32 %v1368, %v1605
    %1609 = vrot.lane.b32.xlu0 %v154, 112
    %v1610 = vpop.permute.xlu0 %1609
    %1611 = vrot.lane.b32.xlu0 %v154, 80
    %v1612 = vpop.permute.xlu0 %1611
    %v1613 = vsel %vm172, %v1610, 0
    %v1615 = vsel %vm172, %v1612, 0
    %1617 = vmatprep.subr.mxu0 0.0
    %1618 = vmatpush1.xpose.msra.mxu0 %v1615
    %1619 = vmatprep.subr.mxu0 0.0
    %1620 = vmatpush1.xpose.msra.mxu0 0.0
    %1621 = vmatprep.subr.mxu0 0.0
    %1622 = vmatpush1.xpose.msra.mxu0 0.0
    %1623 = vmatprep.subr.mxu0 0.0
    %1624 = vmatpush1.xpose.msra.mxu0 0.0
    %1625 = vmatprep.subr.mxu0 0.0
    %1626 = vmatpush1.xpose.msra.mxu0 0.0
    %1627 = vmatprep.subr.mxu0 0.0
    %1628 = vmatpush1.xpose.msra.mxu0 0.0
    %1629 = vmatprep.subr.mxu0 0.0
    %1630 = vmatpush1.xpose.msra.mxu0 0.0
    %1631 = vmatprep.subr.mxu0 0.0
    %1632 = vmatpush1.xpose.msra.mxu0 0.0
    %1633 = vmatprep.subr.mxu0 0.0
    %1634 = vmatpush1.xpose.msra.mxu0 0.0
    %1635 = vmatprep.subr.mxu0 0.0
    %1636 = vmatpush1.xpose.msra.mxu0 0.0
    %1637 = vmatprep.subr.mxu0 0.0
    %1638 = vmatpush1.xpose.msra.mxu0 0.0
    %1639 = vmatprep.subr.mxu0 0.0
    %1640 = vmatpush1.xpose.msra.mxu0 0.0
    %1641 = vmatprep.subr.mxu0 0.0
    %1642 = vmatpush1.xpose.msra.mxu0 0.0
    %1643 = vmatprep.subr.mxu0 0.0
    %1644 = vmatpush1.xpose.msra.mxu0 0.0
    %1645 = vmatprep.subr.mxu0 0.0
    %1646 = vmatpush1.xpose.msra.mxu0 0.0
    %1647 = vmatprep.subr.mxu0 0.0
    %1648 = vmatpush1.xpose.msra.mxu0 0.0
    %1649 = vmatprep.subr.mxu0 0.0
    %1650 = vmatpush1.xpose.msra.mxu0 0.0
    %1651 = vmatprep.subr.mxu0 0.0
    %1652 = vmatpush1.xpose.msra.mxu0 0.0
    %1653 = vmatprep.subr.mxu0 0.0
    %1654 = vmatpush1.xpose.msra.mxu0 0.0
    %1655 = vmatprep.subr.mxu0 0.0
    %1656 = vmatpush1.xpose.msra.mxu0 0.0
    %1657 = vmatprep.subr.mxu0 0.0
    %1658 = vmatpush1.xpose.msra.mxu0 0.0
    %1659 = vmatprep.subr.mxu0 0.0
    %1660 = vmatpush1.xpose.msra.mxu0 0.0
    %1661 = vmatprep.subr.mxu0 0.0
    %1662 = vmatpush1.xpose.msra.mxu0 0.0
    %1663 = vmatprep.subr.mxu0 0.0
    %1664 = vmatpush1.xpose.msra.mxu0 0.0
    %1665 = vmatprep.subr.mxu0 0.0
    %1666 = vmatpush1.xpose.msra.mxu0 0.0
    %1667 = vmatprep.subr.mxu0 0.0
    %1668 = vmatpush1.xpose.msra.mxu0 0.0
    %1669 = vmatprep.subr.mxu0 0.0
    %1670 = vmatpush1.xpose.msra.mxu0 0.0
    %1671 = vmatprep.subr.mxu0 0.0
    %1672 = vmatpush1.xpose.msra.mxu0 0.0
    %1673 = vmatprep.subr.mxu0 0.0
    %1674 = vmatpush1.xpose.msra.mxu0 0.0
    %1675 = vmatprep.subr.mxu0 0.0
    %1676 = vmatpush1.xpose.msra.mxu0 0.0
    %1677 = vmatprep.subr.mxu0 0.0
    %1678 = vmatpush1.xpose.msra.mxu0 0.0
    %1679 = vmatprep.subr.mxu0 0.0
    %1680 = vmatpush1.xpose.msra.mxu0 0.0
    %1681 = vmatprep.mubr.f32.mxu0 0.0
    %1682 = vmatmul.mubr.f32.gmra.mrb[0].mxu0 %v1613
    %v1683 = vpop.f32.mrb[0].mxu0
    %v1684 = vadd.f32 0.0, %v1683
    %v1685 = vpop.f32.mrb[0].mxu0
    %1686 = vdwg.mxu0
    %v1687 = vmul.f32 %v1684, 0.35355338
    %v1688 = vsel %vm172, %v1687, -inf
    %1689 = vmax.xlane.f32.xlu0 %v1688
    %v1690 = vpop.xlane.xlu0 %1689
    %v1691 = vsub.f32 %v1687, %v1690
    %v1692 = vmul.f32 %v1691, 1.442695
    %v1693 = vpow.pop %v1692
    %v1694 = vsel %vm172, %v1693, 0.0
    %1695 = vadd.xlane.f32.xlu0 %v1694
    %v1696 = vpop.xlane.xlu0 %1695
    %v1697 = vrcp.pop %v1696
    %v1698 = vmul.f32 %v1693, %v1697
    %1699 = vrot.lane.b32.xlu0 %v154, 48
    %v1700 = vpop.permute.xlu0 %1699
    %v1703 = vsel %vm172, %v1698, 0
    %1705 = vmatprep.subr.mxu0 0.0
    %1706 = vmatpush1.msra.mxu0 %v1700
    %1707 = vmatprep.subr.mxu0 0.0
    %1708 = vmatpush1.msra.mxu0 0.0
    %1709 = vmatprep.subr.mxu0 0.0
    %1710 = vmatpush1.msra.mxu0 0.0
    %1711 = vmatprep.subr.mxu0 0.0
    %1712 = vmatpush1.msra.mxu0 0.0
    %1713 = vmatprep.subr.mxu0 0.0
    %1714 = vmatpush1.msra.mxu0 0.0
    %1715 = vmatprep.subr.mxu0 0.0
    %1716 = vmatpush1.msra.mxu0 0.0
    %1717 = vmatprep.subr.mxu0 0.0
    %1718 = vmatpush1.msra.mxu0 0.0
    %1719 = vmatprep.subr.mxu0 0.0
    %1720 = vmatpush1.msra.mxu0 0.0
    %1721 = vmatprep.subr.mxu0 0.0
    %1722 = vmatpush1.msra.mxu0 0.0
    %1723 = vmatprep.subr.mxu0 0.0
    %1724 = vmatpush1.msra.mxu0 0.0
    %1725 = vmatprep.subr.mxu0 0.0
    %1726 = vmatpush1.msra.mxu0 0.0
    %1727 = vmatprep.subr.mxu0 0.0
    %1728 = vmatpush1.msra.mxu0 0.0
    %1729 = vmatprep.subr.mxu0 0.0
    %1730 = vmatpush1.msra.mxu0 0.0
    %1731 = vmatprep.subr.mxu0 0.0
    %1732 = vmatpush1.msra.mxu0 0.0
    %1733 = vmatprep.subr.mxu0 0.0
    %1734 = vmatpush1.msra.mxu0 0.0
    %1735 = vmatprep.subr.mxu0 0.0
    %1736 = vmatpush1.msra.mxu0 0.0
    %1737 = vmatprep.subr.mxu0 0.0
    %1738 = vmatpush1.msra.mxu0 0.0
    %1739 = vmatprep.subr.mxu0 0.0
    %1740 = vmatpush1.msra.mxu0 0.0
    %1741 = vmatprep.subr.mxu0 0.0
    %1742 = vmatpush1.msra.mxu0 0.0
    %1743 = vmatprep.subr.mxu0 0.0
    %1744 = vmatpush1.msra.mxu0 0.0
    %1745 = vmatprep.subr.mxu0 0.0
    %1746 = vmatpush1.msra.mxu0 0.0
    %1747 = vmatprep.subr.mxu0 0.0
    %1748 = vmatpush1.msra.mxu0 0.0
    %1749 = vmatprep.subr.mxu0 0.0
    %1750 = vmatpush1.msra.mxu0 0.0
    %1751 = vmatprep.subr.mxu0 0.0
    %1752 = vmatpush1.msra.mxu0 0.0
    %1753 = vmatprep.subr.mxu0 0.0
    %1754 = vmatpush1.msra.mxu0 0.0
    %1755 = vmatprep.subr.mxu0 0.0
    %1756 = vmatpush1.msra.mxu0 0.0
    %1757 = vmatprep.subr.mxu0 0.0
    %1758 = vmatpush1.msra.mxu0 0.0
    %1759 = vmatprep.subr.mxu0 0.0
    %1760 = vmatpush1.msra.mxu0 0.0
    %1761 = vmatprep.subr.mxu0 0.0
    %1762 = vmatpush1.msra.mxu0 0.0
    %1763 = vmatprep.subr.mxu0 0.0
    %1764 = vmatpush1.msra.mxu0 0.0
    %1765 = vmatprep.subr.mxu0 0.0
    %1766 = vmatpush1.msra.mxu0 0.0
    %1767 = vmatprep.subr.mxu0 0.0
    %1768 = vmatpush1.msra.mxu0 0.0
    %1769 = vmatprep.mubr.f32.mxu0 0.0
    %1770 = vmatmul.mubr.f32.gmra.mrb[0].mxu0 %v1703
    %v1771 = vpop.f32.mrb[0].mxu0
    %v1772 = vadd.f32 0.0, %v1771
    %v1773 = vpop.f32.mrb[0].mxu0
    %1774 = vdwg.mxu0
    %v1776 = vsel %vm172, %v1772, 0
    %1778 = vmatprep.subr.mxu0 0.0
    %1779 = vmatpush1.msra.mxu0 %v159
    %1780 = vmatprep.subr.mxu0 0.0
    %1781 = vmatpush1.msra.mxu0 0.0
    %1782 = vmatprep.subr.mxu0 0.0
    %1783 = vmatpush1.msra.mxu0 0.0
    %1784 = vmatprep.subr.mxu0 0.0
    %1785 = vmatpush1.msra.mxu0 0.0
    %1786 = vmatprep.subr.mxu0 0.0
    %1787 = vmatpush1.msra.mxu0 0.0
    %1788 = vmatprep.subr.mxu0 0.0
    %1789 = vmatpush1.msra.mxu0 0.0
    %1790 = vmatprep.subr.mxu0 0.0
    %1791 = vmatpush1.msra.mxu0 0.0
    %1792 = vmatprep.subr.mxu0 0.0
    %1793 = vmatpush1.msra.mxu0 0.0
    %1794 = vmatprep.subr.mxu0 0.0
    %1795 = vmatpush1.msra.mxu0 0.0
    %1796 = vmatprep.subr.mxu0 0.0
    %1797 = vmatpush1.msra.mxu0 0.0
    %1798 = vmatprep.subr.mxu0 0.0
    %1799 = vmatpush1.msra.mxu0 0.0
    %1800 = vmatprep.subr.mxu0 0.0
    %1801 = vmatpush1.msra.mxu0 0.0
    %1802 = vmatprep.subr.mxu0 0.0
    %1803 = vmatpush1.msra.mxu0 0.0
    %1804 = vmatprep.subr.mxu0 0.0
    %1805 = vmatpush1.msra.mxu0 0.0
    %1806 = vmatprep.subr.mxu0 0.0
    %1807 = vmatpush1.msra.mxu0 0.0
    %1808 = vmatprep.subr.mxu0 0.0
    %1809 = vmatpush1.msra.mxu0 0.0
    %1810 = vmatprep.subr.mxu0 0.0
    %1811 = vmatpush1.msra.mxu0 0.0
    %1812 = vmatprep.subr.mxu0 0.0
    %1813 = vmatpush1.msra.mxu0 0.0
    %1814 = vmatprep.subr.mxu0 0.0
    %1815 = vmatpush1.msra.mxu0 0.0
    %1816 = vmatprep.subr.mxu0 0.0
    %1817 = vmatpush1.msra.mxu0 0.0
    %1818 = vmatprep.subr.mxu0 0.0
    %1819 = vmatpush1.msra.mxu0 0.0
    %1820 = vmatprep.subr.mxu0 0.0
    %1821 = vmatpush1.msra.mxu0 0.0
    %1822 = vmatprep.subr.mxu0 0.0
    %1823 = vmatpush1.msra.mxu0 0.0
    %1824 = vmatprep.subr.mxu0 0.0
    %1825 = vmatpush1.msra.mxu0 0.0
    %1826 = vmatprep.subr.mxu0 0.0
    %1827 = vmatpush1.msra.mxu0 0.0
    %1828 = vmatprep.subr.mxu0 0.0
    %1829 = vmatpush1.msra.mxu0 0.0
    %1830 = vmatprep.subr.mxu0 0.0
    %1831 = vmatpush1.msra.mxu0 0.0
    %1832 = vmatprep.subr.mxu0 0.0
    %1833 = vmatpush1.msra.mxu0 0.0
    %1834 = vmatprep.subr.mxu0 0.0
    %1835 = vmatpush1.msra.mxu0 0.0
    %1836 = vmatprep.subr.mxu0 0.0
    %1837 = vmatpush1.msra.mxu0 0.0
    %1838 = vmatprep.subr.mxu0 0.0
    %1839 = vmatpush1.msra.mxu0 0.0
    %1840 = vmatprep.subr.mxu0 0.0
    %1841 = vmatpush1.msra.mxu0 0.0
    %1842 = vmatprep.mubr.f32.mxu0 0.0
    %1843 = vmatmul.mubr.f32.gmra.mrb[0].mxu0 %v1776
    %v1844 = vpop.f32.mrb[0].mxu0
    %v1845 = vadd.f32 0.0, %v1844
    %v1846 = vpop.f32.mrb[0].mxu0
    %1847 = vdwg.mxu0
    %v1848 = vadd.f32 %v1608, %v1845
    %1849 = vrot.lane.b32.xlu0 %v154, 104
    %v1850 = vpop.permute.xlu0 %1849
    %1851 = vrot.lane.b32.xlu0 %v154, 72
    %v1852 = vpop.permute.xlu0 %1851
    %v1853 = vsel %vm172, %v1850, 0
    %v1855 = vsel %vm172, %v1852, 0
    %1857 = vmatprep.subr.mxu0 0.0
    %1858 = vmatpush1.xpose.msra.mxu0 %v1855
    %1859 = vmatprep.subr.mxu0 0.0
    %1860 = vmatpush1.xpose.msra.mxu0 0.0
    %1861 = vmatprep.subr.mxu0 0.0
    %1862 = vmatpush1.xpose.msra.mxu0 0.0
    %1863 = vmatprep.subr.mxu0 0.0
    %1864 = vmatpush1.xpose.msra.mxu0 0.0
    %1865 = vmatprep.subr.mxu0 0.0
    %1866 = vmatpush1.xpose.msra.mxu0 0.0
    %1867 = vmatprep.subr.mxu0 0.0
    %1868 = vmatpush1.xpose.msra.mxu0 0.0
    %1869 = vmatprep.subr.mxu0 0.0
    %1870 = vmatpush1.xpose.msra.mxu0 0.0
    %1871 = vmatprep.subr.mxu0 0.0
    %1872 = vmatpush1.xpose.msra.mxu0 0.0
    %1873 = vmatprep.subr.mxu0 0.0
    %1874 = vmatpush1.xpose.msra.mxu0 0.0
    %1875 = vmatprep.subr.mxu0 0.0
    %1876 = vmatpush1.xpose.msra.mxu0 0.0
    %1877 = vmatprep.subr.mxu0 0.0
    %1878 = vmatpush1.xpose.msra.mxu0 0.0
    %1879 = vmatprep.subr.mxu0 0.0
    %1880 = vmatpush1.xpose.msra.mxu0 0.0
    %1881 = vmatprep.subr.mxu0 0.0
    %1882 = vmatpush1.xpose.msra.mxu0 0.0
    %1883 = vmatprep.subr.mxu0 0.0
    %1884 = vmatpush1.xpose.msra.mxu0 0.0
    %1885 = vmatprep.subr.mxu0 0.0
    %1886 = vmatpush1.xpose.msra.mxu0 0.0
    %1887 = vmatprep.subr.mxu0 0.0
    %1888 = vmatpush1.xpose.msra.mxu0 0.0
    %1889 = vmatprep.subr.mxu0 0.0
    %1890 = vmatpush1.xpose.msra.mxu0 0.0
    %1891 = vmatprep.subr.mxu0 0.0
    %1892 = vmatpush1.xpose.msra.mxu0 0.0
    %1893 = vmatprep.subr.mxu0 0.0
    %1894 = vmatpush1.xpose.msra.mxu0 0.0
    %1895 = vmatprep.subr.mxu0 0.0
    %1896 = vmatpush1.xpose.msra.mxu0 0.0
    %1897 = vmatprep.subr.mxu0 0.0
    %1898 = vmatpush1.xpose.msra.mxu0 0.0
    %1899 = vmatprep.subr.mxu0 0.0
    %1900 = vmatpush1.xpose.msra.mxu0 0.0
    %1901 = vmatprep.subr.mxu0 0.0
    %1902 = vmatpush1.xpose.msra.mxu0 0.0
    %1903 = vmatprep.subr.mxu0 0.0
    %1904 = vmatpush1.xpose.msra.mxu0 0.0
    %1905 = vmatprep.subr.mxu0 0.0
    %1906 = vmatpush1.xpose.msra.mxu0 0.0
    %1907 = vmatprep.subr.mxu0 0.0
    %1908 = vmatpush1.xpose.msra.mxu0 0.0
    %1909 = vmatprep.subr.mxu0 0.0
    %1910 = vmatpush1.xpose.msra.mxu0 0.0
    %1911 = vmatprep.subr.mxu0 0.0
    %1912 = vmatpush1.xpose.msra.mxu0 0.0
    %1913 = vmatprep.subr.mxu0 0.0
    %1914 = vmatpush1.xpose.msra.mxu0 0.0
    %1915 = vmatprep.subr.mxu0 0.0
    %1916 = vmatpush1.xpose.msra.mxu0 0.0
    %1917 = vmatprep.subr.mxu0 0.0
    %1918 = vmatpush1.xpose.msra.mxu0 0.0
    %1919 = vmatprep.subr.mxu0 0.0
    %1920 = vmatpush1.xpose.msra.mxu0 0.0
    %1921 = vmatprep.mubr.f32.mxu0 0.0
    %1922 = vmatmul.mubr.f32.gmra.mrb[0].mxu0 %v1853
    %v1923 = vpop.f32.mrb[0].mxu0
    %v1924 = vadd.f32 0.0, %v1923
    %v1925 = vpop.f32.mrb[0].mxu0
    %1926 = vdwg.mxu0
    %v1927 = vmul.f32 %v1924, 0.35355338
    %v1928 = vsel %vm172, %v1927, -inf
    %1929 = vmax.xlane.f32.xlu0 %v1928
    %v1930 = vpop.xlane.xlu0 %1929
    %v1931 = vsub.f32 %v1927, %v1930
    %v1932 = vmul.f32 %v1931, 1.442695
    %v1933 = vpow.pop %v1932
    %v1934 = vsel %vm172, %v1933, 0.0
    %1935 = vadd.xlane.f32.xlu0 %v1934
    %v1936 = vpop.xlane.xlu0 %1935
    %v1937 = vrcp.pop %v1936
    %v1938 = vmul.f32 %v1933, %v1937
    %1939 = vrot.lane.b32.xlu0 %v154, 40
    %v1940 = vpop.permute.xlu0 %1939
    %v1943 = vsel %vm172, %v1938, 0
    %1945 = vmatprep.subr.mxu0 0.0
    %1946 = vmatpush1.msra.mxu0 %v1940
    %1947 = vmatprep.subr.mxu0 0.0
    %1948 = vmatpush1.msra.mxu0 0.0
    %1949 = vmatprep.subr.mxu0 0.0
    %1950 = vmatpush1.msra.mxu0 0.0
    %1951 = vmatprep.subr.mxu0 0.0
    %1952 = vmatpush1.msra.mxu0 0.0
    %1953 = vmatprep.subr.mxu0 0.0
    %1954 = vmatpush1.msra.mxu0 0.0
    %1955 = vmatprep.subr.mxu0 0.0
    %1956 = vmatpush1.msra.mxu0 0.0
    %1957 = vmatprep.subr.mxu0 0.0
    %1958 = vmatpush1.msra.mxu0 0.0
    %1959 = vmatprep.subr.mxu0 0.0
    %1960 = vmatpush1.msra.mxu0 0.0
    %1961 = vmatprep.subr.mxu0 0.0
    %1962 = vmatpush1.msra.mxu0 0.0
    %1963 = vmatprep.subr.mxu0 0.0
    %1964 = vmatpush1.msra.mxu0 0.0
    %1965 = vmatprep.subr.mxu0 0.0
    %1966 = vmatpush1.msra.mxu0 0.0
    %1967 = vmatprep.subr.mxu0 0.0
    %1968 = vmatpush1.msra.mxu0 0.0
    %1969 = vmatprep.subr.mxu0 0.0
    %1970 = vmatpush1.msra.mxu0 0.0
    %1971 = vmatprep.subr.mxu0 0.0
    %1972 = vmatpush1.msra.mxu0 0.0
    %1973 = vmatprep.subr.mxu0 0.0
    %1974 = vmatpush1.msra.mxu0 0.0
    %1975 = vmatprep.subr.mxu0 0.0
    %1976 = vmatpush1.msra.mxu0 0.0
    %1977 = vmatprep.subr.mxu0 0.0
    %1978 = vmatpush1.msra.mxu0 0.0
    %1979 = vmatprep.subr.mxu0 0.0
    %1980 = vmatpush1.msra.mxu0 0.0
    %1981 = vmatprep.subr.mxu0 0.0
    %1982 = vmatpush1.msra.mxu0 0.0
    %1983 = vmatprep.subr.mxu0 0.0
    %1984 = vmatpush1.msra.mxu0 0.0
    %1985 = vmatprep.subr.mxu0 0.0
    %1986 = vmatpush1.msra.mxu0 0.0
    %1987 = vmatprep.subr.mxu0 0.0
    %1988 = vmatpush1.msra.mxu0 0.0
    %1989 = vmatprep.subr.mxu0 0.0
    %1990 = vmatpush1.msra.mxu0 0.0
    %1991 = vmatprep.subr.mxu0 0.0
    %1992 = vmatpush1.msra.mxu0 0.0
    %1993 = vmatprep.subr.mxu0 0.0
    %1994 = vmatpush1.msra.mxu0 0.0
    %1995 = vmatprep.subr.mxu0 0.0
    %1996 = vmatpush1.msra.mxu0 0.0
    %1997 = vmatprep.subr.mxu0 0.0
    %1998 = vmatpush1.msra.mxu0 0.0
    %1999 = vmatprep.subr.mxu0 0.0
    %2000 = vmatpush1.msra.mxu0 0.0
    %2001 = vmatprep.subr.mxu0 0.0
    %2002 = vmatpush1.msra.mxu0 0.0
    %2003 = vmatprep.subr.mxu0 0.0
    %2004 = vmatpush1.msra.mxu0 0.0
    %2005 = vmatprep.subr.mxu0 0.0
    %2006 = vmatpush1.msra.mxu0 0.0
    %2007 = vmatprep.subr.mxu0 0.0
    %2008 = vmatpush1.msra.mxu0 0.0
    %2009 = vmatprep.mubr.f32.mxu0 0.0
    %2010 = vmatmul.mubr.f32.gmra.mrb[0].mxu0 %v1943
    %v2011 = vpop.f32.mrb[0].mxu0
    %v2012 = vadd.f32 0.0, %v2011
    %v2013 = vpop.f32.mrb[0].mxu0
    %2014 = vdwg.mxu0
    %v2016 = vsel %vm172, %v2012, 0
    %2018 = vmatprep.subr.mxu0 0.0
    %2019 = vmatpush1.msra.mxu0 %v160
    %2020 = vmatprep.subr.mxu0 0.0
    %2021 = vmatpush1.msra.mxu0 0.0
    %2022 = vmatprep.subr.mxu0 0.0
    %2023 = vmatpush1.msra.mxu0 0.0
    %2024 = vmatprep.subr.mxu0 0.0
    %2025 = vmatpush1.msra.mxu0 0.0
    %2026 = vmatprep.subr.mxu0 0.0
    %2027 = vmatpush1.msra.mxu0 0.0
    %2028 = vmatprep.subr.mxu0 0.0
    %2029 = vmatpush1.msra.mxu0 0.0
    %2030 = vmatprep.subr.mxu0 0.0
    %2031 = vmatpush1.msra.mxu0 0.0
    %2032 = vmatprep.subr.mxu0 0.0
    %2033 = vmatpush1.msra.mxu0 0.0
    %2034 = vmatprep.subr.mxu0 0.0
    %2035 = vmatpush1.msra.mxu0 0.0
    %2036 = vmatprep.subr.mxu0 0.0
    %2037 = vmatpush1.msra.mxu0 0.0
    %2038 = vmatprep.subr.mxu0 0.0
    %2039 = vmatpush1.msra.mxu0 0.0
    %2040 = vmatprep.subr.mxu0 0.0
    %2041 = vmatpush1.msra.mxu0 0.0
    %2042 = vmatprep.subr.mxu0 0.0
    %2043 = vmatpush1.msra.mxu0 0.0
    %2044 = vmatprep.subr.mxu0 0.0
    %2045 = vmatpush1.msra.mxu0 0.0
    %2046 = vmatprep.subr.mxu0 0.0
    %2047 = vmatpush1.msra.mxu0 0.0
    %2048 = vmatprep.subr.mxu0 0.0
    %2049 = vmatpush1.msra.mxu0 0.0
    %2050 = vmatprep.subr.mxu0 0.0
    %2051 = vmatpush1.msra.mxu0 0.0
    %2052 = vmatprep.subr.mxu0 0.0
    %2053 = vmatpush1.msra.mxu0 0.0
    %2054 = vmatprep.subr.mxu0 0.0
    %2055 = vmatpush1.msra.mxu0 0.0
    %2056 = vmatprep.subr.mxu0 0.0
    %2057 = vmatpush1.msra.mxu0 0.0
    %2058 = vmatprep.subr.mxu0 0.0
    %2059 = vmatpush1.msra.mxu0 0.0
    %2060 = vmatprep.subr.mxu0 0.0
    %2061 = vmatpush1.msra.mxu0 0.0
    %2062 = vmatprep.subr.mxu0 0.0
    %2063 = vmatpush1.msra.mxu0 0.0
    %2064 = vmatprep.subr.mxu0 0.0
    %2065 = vmatpush1.msra.mxu0 0.0
    %2066 = vmatprep.subr.mxu0 0.0
    %2067 = vmatpush1.msra.mxu0 0.0
    %2068 = vmatprep.subr.mxu0 0.0
    %2069 = vmatpush1.msra.mxu0 0.0
    %2070 = vmatprep.subr.mxu0 0.0
    %2071 = vmatpush1.msra.mxu0 0.0
    %2072 = vmatprep.subr.mxu0 0.0
    %2073 = vmatpush1.msra.mxu0 0.0
    %2074 = vmatprep.subr.mxu0 0.0
    %2075 = vmatpush1.msra.mxu0 0.0
    %2076 = vmatprep.subr.mxu0 0.0
    %2077 = vmatpush1.msra.mxu0 0.0
    %2078 = vmatprep.subr.mxu0 0.0
    %2079 = vmatpush1.msra.mxu0 0.0
    %2080 = vmatprep.subr.mxu0 0.0
    %2081 = vmatpush1.msra.mxu0 0.0
    %2082 = vmatprep.mubr.f32.mxu0 0.0
    %2083 = vmatmul.mubr.f32.gmra.mrb[0].mxu0 %v2016
    %v2084 = vpop.f32.mrb[0].mxu0
    %v2085 = vadd.f32 0.0, %v2084
    %v2086 = vpop.f32.mrb[0].mxu0
    %2087 = vdwg.mxu0
    %v2088 = vadd.f32 %v1848, %v2085
    %2089 = vst.msk [vmem:[#allocation8 + $0x8] sm:$0xff] %vm75, %v2088
    // Predicated region
    $region34: #{tpu_custom_call.1} parent=1 // pred_check
      _
    $region35: #{tpu_custom_call.1} parent=1 // pred_check_branch
      %2091 = sbr.rel (0) target = $region37
    $region36: #{tpu_custom_call.1} parent=1 // pred_region
      %s2093 = ssub.s32 256, 256
      %2094 = vsyncadd [#allocation4], %s2093
      %s2095 = sshll.u32 [#allocation8], 4
      %s2096 = int_to_ptr.vmem [resolvable:$true] %s2095
      %2101 = dma.vmem_to_hbm [thread:$0]  %s2096, 256, %s5, [#allocation4], 128, 128, 8
    $region37: #{tpu_custom_call.1} parent=1 // pred_fallthru
      _
    // Predicated region
    $region38: #{tpu_custom_call.1} parent=1 // pred_check
      _
    $region39: #{tpu_custom_call.1} parent=1 // pred_check_branch
      %2103 = sbr.rel (0) target = $region41
    $region40: #{tpu_custom_call.1} parent=1 // pred_region
      %2104 = dma.done [#allocation4], 256
    $region41: #{tpu_custom_call.1} parent=1 // pred_fallthru
      _
    %2105 = vsyncpa [#allocation3], 1
    %2106 = vsyncpa [#allocation6], 1
    %2107 = vsyncpa [#allocation4], 1

</llo_original>
